<compile_context>
chip_gen: v7x
topology: tpu7x:2x2x1
jax: 0.10.0
libtpu: 0.0.40
codegen_flags: <defaults>
</compile_context>

<pallas_src>
import functools

import jax
import jax.numpy as jnp
from jax.experimental import pallas as pl
from jax.experimental.pallas import tpu as pltpu


# ----------------------------------------------------------------------------
# Tunables
# ----------------------------------------------------------------------------
# Matmul-weight storage / MXU operand dtype.  bf16 halves weight DMA + VMEM and runs
# the MXU at native rate on v5e/v6e/v7x; flip to jnp.float32 for bit-closeness to the
# PyTorch reference (accumulation is f32 either way).
WEIGHT_DTYPE = jnp.bfloat16
LN_EPS = 1e-5
MAX_BATCH_TILE = 8                  # cap on batch elements packed per grid step
VMEM_LIMIT = 32 * 1024 * 1024       # scoped-VMEM headroom; safe on v5e/v6e/v7x (64 MiB phys on v7x)


def _prefer_tanh_gelu() -> bool:
    # v5e has no bf16 VPU/EUP: erf lowers to a long f32 VALU polynomial, which is the
    # FFN bottleneck there -> route GELU through the otherwise-idle EUP tanh slot.
    # v6e/v7x keep exact erf (torch.nn.GELU default).
    try:
        return "v5" in jax.devices()[0].device_kind.lower()
    except Exception:  # pragma: no cover - backend not initialised / CPU fallback
        return False


GELU_TANH_APPROX = _prefer_tanh_gelu()


def _gelu(x):
    if GELU_TANH_APPROX:
        return 0.5 * x * (1.0 + jnp.tanh(0.7978845608028654 * (x + 0.044715 * x * x * x)))
    return 0.5 * x * (1.0 + jax.lax.erf(x * 0.7071067811865476))


def _layernorm(y, gamma, beta, eps):
    mu = jnp.mean(y, axis=-1, keepdims=True)
    var = jnp.mean(jnp.square(y - mu), axis=-1, keepdims=True)
    return (y - mu) * jax.lax.rsqrt(var + eps) * gamma + beta


def _batch_tile(batch: int) -> int:
    """Batch elements per grid step.

    Packs as many batch elements per step as reasonable (amortizes the ~0.35 us
    per-step overhead; MXU rows M = TB * S) while keeping >= 2 grid steps whenever
    batch >= 2 so both v7x TensorCores get work (v5e/v6e have one TC, no cost there).
    """
    if batch <= 1:
        return 1
    return max(1, min(MAX_BATCH_TILE, (batch + 1) // 2))


# ----------------------------------------------------------------------------
# The single fused KWT kernel.
#   One grid step processes TB batch elements end-to-end:
#     frames -> lin_proj -> [cls | proj] + pos -> depth x (attn + FFN) -> pool -> head
#   Only the (TB, T, F) input frames and the (TB, 1, L) logits touch HBM per step;
#   every activation stays in VMEM/vregs.
# ----------------------------------------------------------------------------
def _kwt_kernel(img_ref, lin_w_ref, lin_b_ref, cls_ref, pos_ref,
                qkv_w_ref, out_w_ref, out_b_ref, ln1_g_ref, ln1_b_ref,
                ff1_w_ref, ff1_b_ref, ff2_w_ref, ff2_b_ref, ln2_g_ref, ln2_b_ref,
                head_w_ref, head_b_ref,
                logits_ref,
                x_scr, head_scr,
                *, heads, dim_head, pool, eps):
    TB, T, F = img_ref.shape
    S = T + 1
    D = lin_w_ref.shape[1]
    depth = qkv_w_ref.shape[0]
    inner = heads * dim_head
    cdt = lin_w_ref.dtype                                   # MXU operand dtype (bf16/f32)

    # ---- embedding: lin_proj + cls token + positional embedding (no XLA concat) ----
    frames = img_ref[...].reshape(TB * T, F)                 # leading-dim merge only
    proj = jnp.dot(frames.astype(cdt), lin_w_ref[...],
                   preferred_element_type=jnp.float32) + lin_b_ref[...]   # (TB*T, D) f32
    cls_row = cls_ref[...]                                   # (1, D) = g_feature + pos[0]
    pos_t = pos_ref[...]                                     # (T, D)
    for b in range(TB):                                      # static, small
        r0 = b * S
        x_scr[r0:r0 + 1, :] = cls_row
        x_scr[r0 + 1:r0 + S, :] = proj[b * T:(b + 1) * T, :] + pos_t
    x2 = x_scr[...]                                          # (TB*S, D) f32

    # ---- transformer layers (weights stacked along depth; d is static) ----
    for d in range(depth):
        # attention sub-block: qkv -> per-head softmax(QK^T)V -> one out-proj -> +res -> LN
        qkv = jnp.dot(x2.astype(cdt), qkv_w_ref[d],
                      preferred_element_type=jnp.float32)    # (TB*S, 3*inner) f32
        for b in range(TB):                                  # attention is per batch element
            r0 = b * S
            for h in range(heads):
                lo = h * dim_head
                q = qkv[r0:r0 + S, lo:lo + dim_head]         # scale baked into q weights
                k = qkv[r0:r0 + S, inner + lo:inner + lo + dim_head]
                v = qkv[r0:r0 + S, 2 * inner + lo:2 * inner + lo + dim_head]
                s = jax.lax.dot_general(q.astype(cdt), k.astype(cdt),
                                        (((1,), (1,)), ((), ())),
                                        preferred_element_type=jnp.float32)     # (S, S)
                s = s - jnp.max(s, axis=-1, keepdims=True)
                p = jnp.exp(s)
                # approx reciprocal runs on the EUP slot; ~1e-3 rel. vs exact division.
                inv = pl.reciprocal(jnp.sum(p, axis=-1, keepdims=True), approx=True)
                o_h = jnp.dot(p.astype(cdt), v.astype(cdt),
                              preferred_element_type=jnp.float32) * inv         # (S, dh)
                head_scr[r0:r0 + S, lo:lo + dim_head] = o_h
        # single concatenated out-projection: contraction K = inner (not dh per head)
        attn = jnp.dot(head_scr[...].astype(cdt), out_w_ref[d],
                       preferred_element_type=jnp.float32) + out_b_ref[d]
        x2 = _layernorm(attn + x2, ln1_g_ref[d], ln1_b_ref[d], eps)

        # feed-forward sub-block: ff1 -> GELU -> ff2 -> +res -> LN (hidden stays in VMEM)
        hdn = _gelu(jnp.dot(x2.astype(cdt), ff1_w_ref[d],
                            preferred_element_type=jnp.float32) + ff1_b_ref[d])
        y = jnp.dot(hdn.astype(cdt), ff2_w_ref[d],
                    preferred_element_type=jnp.float32) + ff2_b_ref[d] + x2
        x2 = _layernorm(y, ln2_g_ref[d], ln2_b_ref[d], eps)

    # ---- pooling + classification head (fused epilogue; no extra kernel / HBM pass) ----
    for b in range(TB):                                      # static, small
        rows = x2[b * S:(b + 1) * S, :]
        if pool == "mean":
            pooled = jnp.mean(rows, axis=0, keepdims=True)   # (1, D); includes cls token
        else:
            pooled = rows[0:1, :]
        logits = jnp.dot(pooled.astype(cdt), head_w_ref[...],
                         preferred_element_type=jnp.float32) + head_b_ref[...]
        logits_ref[b] = logits.astype(logits_ref.dtype)


# ----------------------------------------------------------------------------
# Forward pass wrapper: one pallas_call for the whole network.
# ----------------------------------------------------------------------------
_WEIGHT_ORDER = ("lin_w", "lin_b", "cls_tok", "pos_t",
                 "qkv_w", "out_w", "out_b", "ln1_g", "ln1_b",
                 "ff1_w", "ff1_b", "ff2_w", "ff2_b", "ln2_g", "ln2_b",
                 "head_w", "head_b")


def kwt_forward(packed, img, cfg):
    B, T, F = img.shape
    D, H, dh = cfg["dim"], cfg["heads"], cfg["dim_head"]
    depth, mlp = cfg["depth"], cfg["mlp_dim"]
    inner = H * dh
    S = T + 1
    L = packed["head_w"].shape[1]

    TB = _batch_tile(B)
    grid = (pl.cdiv(B, TB),)
    # Note: if B % TB != 0 the padded batch elements compute garbage that is dropped on
    # store; every op is independent per batch element / per row, so this is safe.

    weights = [packed[k] for k in _WEIGHT_ORDER]

    def const_spec(a):
        nd = a.ndim
        # Full-array, constant-index block: DMA'd once, resident in VMEM for all steps.
        return pl.BlockSpec(a.shape, lambda *_ignored, _nd=nd: (0,) * _nd)

    in_specs = [pl.BlockSpec((TB, T, F), lambda i: (i, 0, 0))]
    in_specs += [const_spec(a) for a in weights]
    out_spec = pl.BlockSpec((TB, 1, L), lambda i: (i, 0, 0))

    kernel = functools.partial(_kwt_kernel, heads=H, dim_head=dh,
                               pool=cfg["pool"], eps=LN_EPS)

    flops = (2 * B * T * F * D + 2 * B * D * L
             + depth * (2 * B * S * D * 3 * inner + 4 * B * H * S * S * dh
                        + 2 * B * S * inner * D + 4 * B * S * D * mlp))
    transc = depth * B * (H * S * S + S * mlp)
    wbytes = sum(int(a.size) * a.dtype.itemsize for a in weights)
    cost = pl.CostEstimate(flops=int(flops), transcendentals=int(transc),
                           bytes_accessed=int(img.size * img.dtype.itemsize
                                              + wbytes + B * L * 4))

    out = pl.pallas_call(
        kernel,
        out_shape=jax.ShapeDtypeStruct((B, 1, L), jnp.float32),
        grid=grid,
        in_specs=in_specs,
        out_specs=out_spec,
        scratch_shapes=[
            pltpu.VMEM((TB * S, D), jnp.float32),      # activation assembly ([cls|proj]+pos)
            pltpu.VMEM((TB * S, inner), jnp.float32),  # concatenated per-head attn outputs
        ],
        compiler_params=pltpu.CompilerParams(
            dimension_semantics=("parallel",), vmem_limit_bytes=VMEM_LIMIT),
        cost_estimate=cost,
    )(img, *weights)
    return out.reshape(B, L)


# ----------------------------------------------------------------------------
# Parameter initialization (mirrors the PyTorch module's shapes, f32).
# ----------------------------------------------------------------------------
def init_params(key, cfg, num_labels, time_size, freq_size):
    D, H, dh = cfg["dim"], cfg["heads"], cfg["dim_head"]
    inner = H * dh
    mlp, depth = cfg["mlp_dim"], cfg["depth"]
    assert time_size % cfg["patch_x"] == 0 and freq_size % cfg["patch_y"] == 0
    num_patches = (time_size // cfg["patch_x"]) * (freq_size // cfg["patch_y"])
    # KWT.forward projects whole frames, so positional length must equal T + 1.
    assert num_patches == time_size, "forward requires patch_x == 1, patch_y == freq_size"

    def lin_init(k, fan_in, fan_out):
        k1, k2 = jax.random.split(k)
        bound = 1.0 / float(fan_in) ** 0.5
        w = jax.random.uniform(k1, (fan_in, fan_out), jnp.float32, -bound, bound)
        b = jax.random.uniform(k2, (fan_out,), jnp.float32, -bound, bound)
        return w, b

    keys = jax.random.split(key, 4 + depth)
    params = {}
    params["lin_w"], params["lin_b"] = lin_init(keys[0], freq_size, D)
    params["g_feature"] = jax.random.normal(keys[1], (1, 1, D), jnp.float32)
    params["pos_embedding"] = jax.random.normal(keys[2], (1, num_patches + 1, D), jnp.float32)
    params["head_w"], params["head_b"] = lin_init(keys[3], D, num_labels)

    layers = []
    for d in range(depth):
        lk = jax.random.split(keys[4 + d], 4)
        qkv_w, _ = lin_init(lk[0], D, 3 * inner)          # to_qkv has no bias
        out_w, out_b = lin_init(lk[1], inner, D)
        ff1_w, ff1_b = lin_init(lk[2], D, mlp)
        ff2_w, ff2_b = lin_init(lk[3], mlp, D)
        layers.append(dict(
            qkv_w=qkv_w,
            out_w=out_w, out_b=out_b,
            ln1_g=jnp.ones((D,), jnp.float32), ln1_b=jnp.zeros((D,), jnp.float32),
            ff1_w=ff1_w, ff1_b=ff1_b,
            ff2_w=ff2_w, ff2_b=ff2_b,
            ln2_g=jnp.ones((D,), jnp.float32), ln2_b=jnp.zeros((D,), jnp.float32),
        ))
    params["layers"] = layers
    return params


# ----------------------------------------------------------------------------
# One-time packing of PyTorch-layout params into kernel-ready arrays:
#   * per-layer weights stacked along depth (single resident VMEM block each)
#   * matmul weights cast to WEIGHT_DTYPE (bf16) in HBM
#   * softmax scale baked into the q-columns of qkv_w
#   * pos[0] folded into the cls token; biases/LN params reshaped to (depth, 1, dim)
# ----------------------------------------------------------------------------
def pack_params(params, cfg):
    D, H, dh = cfg["dim"], cfg["heads"], cfg["dim_head"]
    inner = H * dh
    scale = dh ** -0.5
    wdt = WEIGHT_DTYPE

    def stack(name):
        return jnp.stack([l[name] for l in params["layers"]], axis=0)

    qkv_w = stack("qkv_w")
    qkv_w = qkv_w.at[:, :, :inner].multiply(scale)          # bake 1/sqrt(dim_head) into q

    return dict(
        lin_w=params["lin_w"].astype(wdt),
        lin_b=params["lin_b"].reshape(1, -1),
        cls_tok=(params["g_feature"].reshape(1, D)
                 + params["pos_embedding"][0, 0:1, :]),      # g_feature + pos[0]
        pos_t=params["pos_embedding"][0, 1:, :],             # (T, D)
        qkv_w=qkv_w.astype(wdt),
        out_w=stack("out_w").astype(wdt),
        out_b=stack("out_b")[:, None, :],
        ln1_g=stack("ln1_g")[:, None, :],
        ln1_b=stack("ln1_b")[:, None, :],
        ff1_w=stack("ff1_w").astype(wdt),
        ff1_b=stack("ff1_b")[:, None, :],
        ff2_w=stack("ff2_w").astype(wdt),
        ff2_b=stack("ff2_b")[:, None, :],
        ln2_g=stack("ln2_g")[:, None, :],
        ln2_b=stack("ln2_b")[:, None, :],
        head_w=params["head_w"].astype(wdt),
        head_b=params["head_b"].reshape(1, -1),
    )


# ----------------------------------------------------------------------------
if __name__ == "__main__":
    cfg = dict(
        patch_x=1, patch_y=16, channels=1,
        dim=32, depth=2, heads=2, dim_head=16, mlp_dim=64,
        dropout=0.0, pool="mean",
    )
    num_labels = 12
    B, T, F = 2, 8, 16           # time_size=8, freq_size=16 -> num_patches = 8

    key = jax.random.PRNGKey(0)
    pkey, xkey = jax.random.split(key)
    params = init_params(pkey, cfg, num_labels, T, F)
    packed = pack_params(params, cfg)
    img = jax.random.normal(xkey, (B, T, F), jnp.float32)

    logits = kwt_forward(packed, img, cfg)
    logits = jax.block_until_ready(logits)
    assert logits.shape == (B, num_labels)
    assert bool(jnp.all(jnp.isfinite(logits)))
    print("KERNEL_OK")
</pallas_src>

<mosaic_0001>
module attributes {stable_mosaic.version = 11 : i64} {
  func.func @_kwt_kernel(%arg0: i32, %arg1: memref<1x8x16xf32, #tpu.memory_space<vmem>>, %arg2: memref<16x32xbf16, #tpu.memory_space<vmem>>, %arg3: memref<1x32xf32, #tpu.memory_space<vmem>>, %arg4: memref<1x32xf32, #tpu.memory_space<vmem>>, %arg5: memref<8x32xf32, #tpu.memory_space<vmem>>, %arg6: memref<2x32x96xbf16, #tpu.memory_space<vmem>>, %arg7: memref<2x32x32xbf16, #tpu.memory_space<vmem>>, %arg8: memref<2x1x32xf32, #tpu.memory_space<vmem>>, %arg9: memref<2x1x32xf32, #tpu.memory_space<vmem>>, %arg10: memref<2x1x32xf32, #tpu.memory_space<vmem>>, %arg11: memref<2x32x64xbf16, #tpu.memory_space<vmem>>, %arg12: memref<2x1x64xf32, #tpu.memory_space<vmem>>, %arg13: memref<2x64x32xbf16, #tpu.memory_space<vmem>>, %arg14: memref<2x1x32xf32, #tpu.memory_space<vmem>>, %arg15: memref<2x1x32xf32, #tpu.memory_space<vmem>>, %arg16: memref<2x1x32xf32, #tpu.memory_space<vmem>>, %arg17: memref<32x12xbf16, #tpu.memory_space<vmem>>, %arg18: memref<1x12xf32, #tpu.memory_space<vmem>>, %arg19: memref<1x1x12xf32, #tpu.memory_space<vmem>>, %arg20: memref<9x32xf32, #tpu.memory_space<vmem>>, %arg21: memref<9x32xf32, #tpu.memory_space<vmem>>) attributes {dimension_semantics = [#tpu.dimension_semantics<parallel>], iteration_bounds = array<i64: 2>, scalar_prefetch = 0 : i64, scratch_operands = 2 : i64, tpu.core_type = #tpu.core_type<tc>, window_params = [{transform_indices = @transform_0, window_bounds = array<i64: 1, 8, 16>}, {pipeline_mode = #tpu.pipeline_mode<synchronous>, transform_indices = @transform_1, window_bounds = array<i64: 16, 32>}, {pipeline_mode = #tpu.pipeline_mode<synchronous>, transform_indices = @transform_2, window_bounds = array<i64: 1, 32>}, {pipeline_mode = #tpu.pipeline_mode<synchronous>, transform_indices = @transform_3, window_bounds = array<i64: 1, 32>}, {pipeline_mode = #tpu.pipeline_mode<synchronous>, transform_indices = @transform_4, window_bounds = array<i64: 8, 32>}, {pipeline_mode = #tpu.pipeline_mode<synchronous>, transform_indices = @transform_5, window_bounds = array<i64: 2, 32, 96>}, {pipeline_mode = #tpu.pipeline_mode<synchronous>, transform_indices = @transform_6, window_bounds = array<i64: 2, 32, 32>}, {pipeline_mode = #tpu.pipeline_mode<synchronous>, transform_indices = @transform_7, window_bounds = array<i64: 2, 1, 32>}, {pipeline_mode = #tpu.pipeline_mode<synchronous>, transform_indices = @transform_8, window_bounds = array<i64: 2, 1, 32>}, {pipeline_mode = #tpu.pipeline_mode<synchronous>, transform_indices = @transform_9, window_bounds = array<i64: 2, 1, 32>}, {pipeline_mode = #tpu.pipeline_mode<synchronous>, transform_indices = @transform_10, window_bounds = array<i64: 2, 32, 64>}, {pipeline_mode = #tpu.pipeline_mode<synchronous>, transform_indices = @transform_11, window_bounds = array<i64: 2, 1, 64>}, {pipeline_mode = #tpu.pipeline_mode<synchronous>, transform_indices = @transform_12, window_bounds = array<i64: 2, 64, 32>}, {pipeline_mode = #tpu.pipeline_mode<synchronous>, transform_indices = @transform_13, window_bounds = array<i64: 2, 1, 32>}, {pipeline_mode = #tpu.pipeline_mode<synchronous>, transform_indices = @transform_14, window_bounds = array<i64: 2, 1, 32>}, {pipeline_mode = #tpu.pipeline_mode<synchronous>, transform_indices = @transform_15, window_bounds = array<i64: 2, 1, 32>}, {pipeline_mode = #tpu.pipeline_mode<synchronous>, transform_indices = @transform_16, window_bounds = array<i64: 32, 12>}, {pipeline_mode = #tpu.pipeline_mode<synchronous>, transform_indices = @transform_17, window_bounds = array<i64: 1, 12>}, {transform_indices = @transform_18, window_bounds = array<i64: 1, 1, 12>}]} {
    %c0 = arith.constant 0 : index
    %c0_0 = arith.constant 0 : index
    %c0_1 = arith.constant 0 : index
    %0 = vector.load %arg1[%c0, %c0_0, %c0_1] : memref<1x8x16xf32, #tpu.memory_space<vmem>>, vector<1x8x16xf32>
    %1 = vector.shape_cast %0 : vector<1x8x16xf32> to vector<8x16xf32>
    %2 = arith.truncf %1 : vector<8x16xf32> to vector<8x16xbf16>
    %c0_2 = arith.constant 0 : index
    %c0_3 = arith.constant 0 : index
    %3 = vector.load %arg2[%c0_2, %c0_3] : memref<16x32xbf16, #tpu.memory_space<vmem>>, vector<16x32xbf16>
    %cst = arith.constant dense<0.000000e+00> : vector<8x32xf32>
    %4 = tpu.matmul %2, %3, %cst {dimension_numbers = #tpu.dot_dimension_numbers<[1], [0], [0], [1], [0, 0, 1, 1], [], []>} : vector<8x16xbf16>, vector<16x32xbf16>, vector<8x32xf32> -> vector<8x32xf32>
    %c0_4 = arith.constant 0 : index
    %c0_5 = arith.constant 0 : index
    %5 = vector.load %arg3[%c0_4, %c0_5] : memref<1x32xf32, #tpu.memory_space<vmem>>, vector<1x32xf32>
    %6 = vector.broadcast %5 : vector<1x32xf32> to vector<8x32xf32>
    %7 = arith.addf %4, %6 : vector<8x32xf32>
    %c0_6 = arith.constant 0 : index
    %c0_7 = arith.constant 0 : index
    %8 = vector.load %arg4[%c0_6, %c0_7] : memref<1x32xf32, #tpu.memory_space<vmem>>, vector<1x32xf32>
    %c0_8 = arith.constant 0 : index
    %c0_9 = arith.constant 0 : index
    %9 = vector.load %arg5[%c0_8, %c0_9] : memref<8x32xf32, #tpu.memory_space<vmem>>, vector<8x32xf32>
    %c0_10 = arith.constant 0 : index
    %c0_11 = arith.constant 0 : index
    %10 = vector.load %arg20[%c0_10, %c0_11] : memref<9x32xf32, #tpu.memory_space<vmem>>, vector<1x32xf32>
    tpu.vector_store %arg20[%c0_10, %c0_11], %8 {strides = array<i32>} : memref<9x32xf32, #tpu.memory_space<vmem>>, vector<1x32xf32>,
    %11 = arith.addf %7, %9 : vector<8x32xf32>
    %c1 = arith.constant 1 : index
    %c0_12 = arith.constant 0 : index
    %12 = vector.load %arg20[%c1, %c0_12] : memref<9x32xf32, #tpu.memory_space<vmem>>, vector<8x32xf32>
    tpu.vector_store %arg20[%c1, %c0_12], %11 {strides = array<i32>} : memref<9x32xf32, #tpu.memory_space<vmem>>, vector<8x32xf32>,
    %c0_13 = arith.constant 0 : index
    %c0_14 = arith.constant 0 : index
    %13 = vector.load %arg20[%c0_13, %c0_14] : memref<9x32xf32, #tpu.memory_space<vmem>>, vector<9x32xf32>
    %14 = arith.truncf %13 : vector<9x32xf32> to vector<9x32xbf16>
    %c0_15 = arith.constant 0 : index
    %c0_16 = arith.constant 0 : index
    %c0_17 = arith.constant 0 : index
    %15 = vector.load %arg6[%c0_15, %c0_16, %c0_17] : memref<2x32x96xbf16, #tpu.memory_space<vmem>>, vector<1x32x96xbf16>
    %16 = vector.shape_cast %15 : vector<1x32x96xbf16> to vector<32x96xbf16>
    %cst_18 = arith.constant dense<0.000000e+00> : vector<9x96xf32>
    %17 = tpu.matmul %14, %16, %cst_18 {dimension_numbers = #tpu.dot_dimension_numbers<[1], [0], [0], [1], [0, 0, 1, 1], [], []>} : vector<9x32xbf16>, vector<32x96xbf16>, vector<9x96xf32> -> vector<9x96xf32>
    %18 = vector.extract_strided_slice %17 {offsets = [0, 0], sizes = [9, 16], strides = [1, 1]} : vector<9x96xf32> to vector<9x16xf32>
    %19 = vector.extract_strided_slice %17 {offsets = [0, 32], sizes = [9, 16], strides = [1, 1]} : vector<9x96xf32> to vector<9x16xf32>
    %20 = vector.extract_strided_slice %17 {offsets = [0, 64], sizes = [9, 16], strides = [1, 1]} : vector<9x96xf32> to vector<9x16xf32>
    %21 = arith.truncf %18 : vector<9x16xf32> to vector<9x16xbf16>
    %22 = arith.truncf %19 : vector<9x16xf32> to vector<9x16xbf16>
    %cst_19 = arith.constant dense<0.000000e+00> : vector<9x9xf32>
    %23 = tpu.matmul %21, %22, %cst_19 {dimension_numbers = #tpu.dot_dimension_numbers<[1], [1], [0], [0], [0, 0, 1, 0], [], []>} : vector<9x16xbf16>, vector<9x16xbf16>, vector<9x9xf32> -> vector<9x9xf32>
    %cst_20 = arith.constant dense<0xFF800000> : vector<9xf32>
    %24 = vector.multi_reduction <maximumf>, %23, %cst_20 [1] : vector<9x9xf32> to vector<9xf32>
    %25 = vector.shape_cast %24 : vector<9xf32> to vector<9x1xf32>
    %26 = vector.broadcast %25 : vector<9x1xf32> to vector<9x9xf32>
    %27 = arith.subf %23, %26 : vector<9x9xf32>
    %28 = math.exp %27 : vector<9x9xf32>
    %cst_21 = arith.constant dense<0.000000e+00> : vector<9xf32>
    %29 = vector.multi_reduction <add>, %28, %cst_21 [1] : vector<9x9xf32> to vector<9xf32>
    %30 = vector.shape_cast %29 : vector<9xf32> to vector<9x1xf32>
    %31 = tpu.reciprocal %30 {approx = true} : vector<9x1xf32> -> vector<9x1xf32>
    %32 = arith.truncf %28 : vector<9x9xf32> to vector<9x9xbf16>
    %33 = arith.truncf %20 : vector<9x16xf32> to vector<9x16xbf16>
    %cst_22 = arith.constant dense<0.000000e+00> : vector<9x16xf32>
    %34 = tpu.matmul %32, %33, %cst_22 {dimension_numbers = #tpu.dot_dimension_numbers<[1], [0], [0], [1], [0, 0, 1, 1], [], []>} : vector<9x9xbf16>, vector<9x16xbf16>, vector<9x16xf32> -> vector<9x16xf32>
    %35 = vector.broadcast %31 : vector<9x1xf32> to vector<9x16xf32>
    %36 = arith.mulf %34, %35 : vector<9x16xf32>
    %c0_23 = arith.constant 0 : index
    %c0_24 = arith.constant 0 : index
    %37 = vector.load %arg21[%c0_23, %c0_24] : memref<9x32xf32, #tpu.memory_space<vmem>>, vector<9x16xf32>
    tpu.vector_store %arg21[%c0_23, %c0_24], %36 {strides = array<i32>} : memref<9x32xf32, #tpu.memory_space<vmem>>, vector<9x16xf32>,
    %38 = vector.extract_strided_slice %17 {offsets = [0, 16], sizes = [9, 16], strides = [1, 1]} : vector<9x96xf32> to vector<9x16xf32>
    %39 = vector.extract_strided_slice %17 {offsets = [0, 48], sizes = [9, 16], strides = [1, 1]} : vector<9x96xf32> to vector<9x16xf32>
    %40 = vector.extract_strided_slice %17 {offsets = [0, 80], sizes = [9, 16], strides = [1, 1]} : vector<9x96xf32> to vector<9x16xf32>
    %41 = arith.truncf %38 : vector<9x16xf32> to vector<9x16xbf16>
    %42 = arith.truncf %39 : vector<9x16xf32> to vector<9x16xbf16>
    %cst_25 = arith.constant dense<0.000000e+00> : vector<9x9xf32>
    %43 = tpu.matmul %41, %42, %cst_25 {dimension_numbers = #tpu.dot_dimension_numbers<[1], [1], [0], [0], [0, 0, 1, 0], [], []>} : vector<9x16xbf16>, vector<9x16xbf16>, vector<9x9xf32> -> vector<9x9xf32>
    %cst_26 = arith.constant dense<0xFF800000> : vector<9xf32>
    %44 = vector.multi_reduction <maximumf>, %43, %cst_26 [1] : vector<9x9xf32> to vector<9xf32>
    %45 = vector.shape_cast %44 : vector<9xf32> to vector<9x1xf32>
    %46 = vector.broadcast %45 : vector<9x1xf32> to vector<9x9xf32>
    %47 = arith.subf %43, %46 : vector<9x9xf32>
    %48 = math.exp %47 : vector<9x9xf32>
    %cst_27 = arith.constant dense<0.000000e+00> : vector<9xf32>
    %49 = vector.multi_reduction <add>, %48, %cst_27 [1] : vector<9x9xf32> to vector<9xf32>
    %50 = vector.shape_cast %49 : vector<9xf32> to vector<9x1xf32>
    %51 = tpu.reciprocal %50 {approx = true} : vector<9x1xf32> -> vector<9x1xf32>
    %52 = arith.truncf %48 : vector<9x9xf32> to vector<9x9xbf16>
    %53 = arith.truncf %40 : vector<9x16xf32> to vector<9x16xbf16>
    %cst_28 = arith.constant dense<0.000000e+00> : vector<9x16xf32>
    %54 = tpu.matmul %52, %53, %cst_28 {dimension_numbers = #tpu.dot_dimension_numbers<[1], [0], [0], [1], [0, 0, 1, 1], [], []>} : vector<9x9xbf16>, vector<9x16xbf16>, vector<9x16xf32> -> vector<9x16xf32>
    %55 = vector.broadcast %51 : vector<9x1xf32> to vector<9x16xf32>
    %56 = arith.mulf %54, %55 : vector<9x16xf32>
    %c0_29 = arith.constant 0 : index
    %c16 = arith.constant 16 : index
    %57 = vector.load %arg21[%c0_29, %c16] : memref<9x32xf32, #tpu.memory_space<vmem>>, vector<9x16xf32>
    tpu.vector_store %arg21[%c0_29, %c16], %56 {strides = array<i32>} : memref<9x32xf32, #tpu.memory_space<vmem>>, vector<9x16xf32>,
    %c0_30 = arith.constant 0 : index
    %c0_31 = arith.constant 0 : index
    %58 = vector.load %arg21[%c0_30, %c0_31] : memref<9x32xf32, #tpu.memory_space<vmem>>, vector<9x32xf32>
    %59 = arith.truncf %58 : vector<9x32xf32> to vector<9x32xbf16>
    %c0_32 = arith.constant 0 : index
    %c0_33 = arith.constant 0 : index
    %c0_34 = arith.constant 0 : index
    %60 = vector.load %arg7[%c0_32, %c0_33, %c0_34] : memref<2x32x32xbf16, #tpu.memory_space<vmem>>, vector<1x32x32xbf16>
    %61 = vector.shape_cast %60 : vector<1x32x32xbf16> to vector<32x32xbf16>
    %cst_35 = arith.constant dense<0.000000e+00> : vector<9x32xf32>
    %62 = tpu.matmul %59, %61, %cst_35 {dimension_numbers = #tpu.dot_dimension_numbers<[1], [0], [0], [1], [0, 0, 1, 1], [], []>} : vector<9x32xbf16>, vector<32x32xbf16>, vector<9x32xf32> -> vector<9x32xf32>
    %c0_36 = arith.constant 0 : index
    %c0_37 = arith.constant 0 : index
    %c0_38 = arith.constant 0 : index
    %63 = vector.load %arg8[%c0_36, %c0_37, %c0_38] : memref<2x1x32xf32, #tpu.memory_space<vmem>>, vector<1x1x32xf32>
    %64 = vector.shape_cast %63 : vector<1x1x32xf32> to vector<1x32xf32>
    %65 = vector.broadcast %64 : vector<1x32xf32> to vector<9x32xf32>
    %66 = arith.addf %62, %65 : vector<9x32xf32>
    %67 = arith.addf %66, %13 : vector<9x32xf32>
    %c0_39 = arith.constant 0 : index
    %c0_40 = arith.constant 0 : index
    %c0_41 = arith.constant 0 : index
    %68 = vector.load %arg9[%c0_39, %c0_40, %c0_41] : memref<2x1x32xf32, #tpu.memory_space<vmem>>, vector<1x1x32xf32>
    %69 = vector.shape_cast %68 : vector<1x1x32xf32> to vector<1x32xf32>
    %c0_42 = arith.constant 0 : index
    %c0_43 = arith.constant 0 : index
    %c0_44 = arith.constant 0 : index
    %70 = vector.load %arg10[%c0_42, %c0_43, %c0_44] : memref<2x1x32xf32, #tpu.memory_space<vmem>>, vector<1x1x32xf32>
    %71 = vector.shape_cast %70 : vector<1x1x32xf32> to vector<1x32xf32>
    %cst_45 = arith.constant dense<0.000000e+00> : vector<9xf32>
    %72 = vector.multi_reduction <add>, %67, %cst_45 [1] : vector<9x32xf32> to vector<9xf32>
    %73 = vector.shape_cast %72 : vector<9xf32> to vector<9x1xf32>
    %cst_46 = arith.constant 3.200000e+01 : f32
    %74 = vector.broadcast %cst_46 : f32 to vector<9x1xf32>
    %75 = arith.divf %73, %74 : vector<9x1xf32>
    %76 = vector.broadcast %75 : vector<9x1xf32> to vector<9x32xf32>
    %77 = arith.subf %67, %76 : vector<9x32xf32>
    %78 = arith.mulf %77, %77 : vector<9x32xf32>
    %cst_47 = arith.constant dense<0.000000e+00> : vector<9xf32>
    %79 = vector.multi_reduction <add>, %78, %cst_47 [1] : vector<9x32xf32> to vector<9xf32>
    %80 = vector.shape_cast %79 : vector<9xf32> to vector<9x1xf32>
    %cst_48 = arith.constant 3.200000e+01 : f32
    %81 = vector.broadcast %cst_48 : f32 to vector<9x1xf32>
    %82 = arith.divf %80, %81 : vector<9x1xf32>
    %83 = vector.broadcast %75 : vector<9x1xf32> to vector<9x32xf32>
    %84 = arith.subf %67, %83 : vector<9x32xf32>
    %cst_49 = arith.constant 9.99999974E-6 : f32
    %85 = vector.broadcast %cst_49 : f32 to vector<9x1xf32>
    %86 = arith.addf %82, %85 : vector<9x1xf32>
    %87 = math.rsqrt %86 : vector<9x1xf32>
    %88 = vector.broadcast %87 : vector<9x1xf32> to vector<9x32xf32>
    %89 = arith.mulf %84, %88 : vector<9x32xf32>
    %90 = vector.broadcast %69 : vector<1x32xf32> to vector<9x32xf32>
    %91 = arith.mulf %89, %90 : vector<9x32xf32>
    %92 = vector.broadcast %71 : vector<1x32xf32> to vector<9x32xf32>
    %93 = arith.addf %91, %92 : vector<9x32xf32>
    %94 = arith.truncf %93 : vector<9x32xf32> to vector<9x32xbf16>
    %c0_50 = arith.constant 0 : index
    %c0_51 = arith.constant 0 : index
    %c0_52 = arith.constant 0 : index
    %95 = vector.load %arg11[%c0_50, %c0_51, %c0_52] : memref<2x32x64xbf16, #tpu.memory_space<vmem>>, vector<1x32x64xbf16>
    %96 = vector.shape_cast %95 : vector<1x32x64xbf16> to vector<32x64xbf16>
    %cst_53 = arith.constant dense<0.000000e+00> : vector<9x64xf32>
    %97 = tpu.matmul %94, %96, %cst_53 {dimension_numbers = #tpu.dot_dimension_numbers<[1], [0], [0], [1], [0, 0, 1, 1], [], []>} : vector<9x32xbf16>, vector<32x64xbf16>, vector<9x64xf32> -> vector<9x64xf32>
    %c0_54 = arith.constant 0 : index
    %c0_55 = arith.constant 0 : index
    %c0_56 = arith.constant 0 : index
    %98 = vector.load %arg12[%c0_54, %c0_55, %c0_56] : memref<2x1x64xf32, #tpu.memory_space<vmem>>, vector<1x1x64xf32>
    %99 = vector.shape_cast %98 : vector<1x1x64xf32> to vector<1x64xf32>
    %100 = vector.broadcast %99 : vector<1x64xf32> to vector<9x64xf32>
    %101 = arith.addf %97, %100 : vector<9x64xf32>
    %cst_57 = arith.constant 5.000000e-01 : f32
    %102 = vector.broadcast %cst_57 : f32 to vector<9x64xf32>
    %103 = arith.mulf %102, %101 : vector<9x64xf32>
    %cst_58 = arith.constant 0.707106769 : f32
    %104 = vector.broadcast %cst_58 : f32 to vector<9x64xf32>
    %105 = arith.mulf %101, %104 : vector<9x64xf32>
    %106 = math.erf %105 : vector<9x64xf32>
    %cst_59 = arith.constant 1.000000e+00 : f32
    %107 = vector.broadcast %cst_59 : f32 to vector<9x64xf32>
    %108 = arith.addf %107, %106 : vector<9x64xf32>
    %109 = arith.mulf %103, %108 : vector<9x64xf32>
    %110 = arith.truncf %109 : vector<9x64xf32> to vector<9x64xbf16>
    %c0_60 = arith.constant 0 : index
    %c0_61 = arith.constant 0 : index
    %c0_62 = arith.constant 0 : index
    %111 = vector.load %arg13[%c0_60, %c0_61, %c0_62] : memref<2x64x32xbf16, #tpu.memory_space<vmem>>, vector<1x64x32xbf16>
    %112 = vector.shape_cast %111 : vector<1x64x32xbf16> to vector<64x32xbf16>
    %cst_63 = arith.constant dense<0.000000e+00> : vector<9x32xf32>
    %113 = tpu.matmul %110, %112, %cst_63 {dimension_numbers = #tpu.dot_dimension_numbers<[1], [0], [0], [1], [0, 0, 1, 1], [], []>} : vector<9x64xbf16>, vector<64x32xbf16>, vector<9x32xf32> -> vector<9x32xf32>
    %c0_64 = arith.constant 0 : index
    %c0_65 = arith.constant 0 : index
    %c0_66 = arith.constant 0 : index
    %114 = vector.load %arg14[%c0_64, %c0_65, %c0_66] : memref<2x1x32xf32, #tpu.memory_space<vmem>>, vector<1x1x32xf32>
    %115 = vector.shape_cast %114 : vector<1x1x32xf32> to vector<1x32xf32>
    %116 = vector.broadcast %115 : vector<1x32xf32> to vector<9x32xf32>
    %117 = arith.addf %113, %116 : vector<9x32xf32>
    %118 = arith.addf %117, %93 : vector<9x32xf32>
    %c0_67 = arith.constant 0 : index
    %c0_68 = arith.constant 0 : index
    %c0_69 = arith.constant 0 : index
    %119 = vector.load %arg15[%c0_67, %c0_68, %c0_69] : memref<2x1x32xf32, #tpu.memory_space<vmem>>, vector<1x1x32xf32>
    %120 = vector.shape_cast %119 : vector<1x1x32xf32> to vector<1x32xf32>
    %c0_70 = arith.constant 0 : index
    %c0_71 = arith.constant 0 : index
    %c0_72 = arith.constant 0 : index
    %121 = vector.load %arg16[%c0_70, %c0_71, %c0_72] : memref<2x1x32xf32, #tpu.memory_space<vmem>>, vector<1x1x32xf32>
    %122 = vector.shape_cast %121 : vector<1x1x32xf32> to vector<1x32xf32>
    %cst_73 = arith.constant dense<0.000000e+00> : vector<9xf32>
    %123 = vector.multi_reduction <add>, %118, %cst_73 [1] : vector<9x32xf32> to vector<9xf32>
    %124 = vector.shape_cast %123 : vector<9xf32> to vector<9x1xf32>
    %cst_74 = arith.constant 3.200000e+01 : f32
    %125 = vector.broadcast %cst_74 : f32 to vector<9x1xf32>
    %126 = arith.divf %124, %125 : vector<9x1xf32>
    %127 = vector.broadcast %126 : vector<9x1xf32> to vector<9x32xf32>
    %128 = arith.subf %118, %127 : vector<9x32xf32>
    %129 = arith.mulf %128, %128 : vector<9x32xf32>
    %cst_75 = arith.constant dense<0.000000e+00> : vector<9xf32>
    %130 = vector.multi_reduction <add>, %129, %cst_75 [1] : vector<9x32xf32> to vector<9xf32>
    %131 = vector.shape_cast %130 : vector<9xf32> to vector<9x1xf32>
    %cst_76 = arith.constant 3.200000e+01 : f32
    %132 = vector.broadcast %cst_76 : f32 to vector<9x1xf32>
    %133 = arith.divf %131, %132 : vector<9x1xf32>
    %134 = vector.broadcast %126 : vector<9x1xf32> to vector<9x32xf32>
    %135 = arith.subf %118, %134 : vector<9x32xf32>
    %cst_77 = arith.constant 9.99999974E-6 : f32
    %136 = vector.broadcast %cst_77 : f32 to vector<9x1xf32>
    %137 = arith.addf %133, %136 : vector<9x1xf32>
    %138 = math.rsqrt %137 : vector<9x1xf32>
    %139 = vector.broadcast %138 : vector<9x1xf32> to vector<9x32xf32>
    %140 = arith.mulf %135, %139 : vector<9x32xf32>
    %141 = vector.broadcast %120 : vector<1x32xf32> to vector<9x32xf32>
    %142 = arith.mulf %140, %141 : vector<9x32xf32>
    %143 = vector.broadcast %122 : vector<1x32xf32> to vector<9x32xf32>
    %144 = arith.addf %142, %143 : vector<9x32xf32>
    %145 = arith.truncf %144 : vector<9x32xf32> to vector<9x32xbf16>
    %c1_78 = arith.constant 1 : index
    %c0_79 = arith.constant 0 : index
    %c0_80 = arith.constant 0 : index
    %146 = vector.load %arg6[%c1_78, %c0_79, %c0_80] : memref<2x32x96xbf16, #tpu.memory_space<vmem>>, vector<1x32x96xbf16>
    %147 = vector.shape_cast %146 : vector<1x32x96xbf16> to vector<32x96xbf16>
    %cst_81 = arith.constant dense<0.000000e+00> : vector<9x96xf32>
    %148 = tpu.matmul %145, %147, %cst_81 {dimension_numbers = #tpu.dot_dimension_numbers<[1], [0], [0], [1], [0, 0, 1, 1], [], []>} : vector<9x32xbf16>, vector<32x96xbf16>, vector<9x96xf32> -> vector<9x96xf32>
    %149 = vector.extract_strided_slice %148 {offsets = [0, 0], sizes = [9, 16], strides = [1, 1]} : vector<9x96xf32> to vector<9x16xf32>
    %150 = vector.extract_strided_slice %148 {offsets = [0, 32], sizes = [9, 16], strides = [1, 1]} : vector<9x96xf32> to vector<9x16xf32>
    %151 = vector.extract_strided_slice %148 {offsets = [0, 64], sizes = [9, 16], strides = [1, 1]} : vector<9x96xf32> to vector<9x16xf32>
    %152 = arith.truncf %149 : vector<9x16xf32> to vector<9x16xbf16>
    %153 = arith.truncf %150 : vector<9x16xf32> to vector<9x16xbf16>
    %cst_82 = arith.constant dense<0.000000e+00> : vector<9x9xf32>
    %154 = tpu.matmul %152, %153, %cst_82 {dimension_numbers = #tpu.dot_dimension_numbers<[1], [1], [0], [0], [0, 0, 1, 0], [], []>} : vector<9x16xbf16>, vector<9x16xbf16>, vector<9x9xf32> -> vector<9x9xf32>
    %cst_83 = arith.constant dense<0xFF800000> : vector<9xf32>
    %155 = vector.multi_reduction <maximumf>, %154, %cst_83 [1] : vector<9x9xf32> to vector<9xf32>
    %156 = vector.shape_cast %155 : vector<9xf32> to vector<9x1xf32>
    %157 = vector.broadcast %156 : vector<9x1xf32> to vector<9x9xf32>
    %158 = arith.subf %154, %157 : vector<9x9xf32>
    %159 = math.exp %158 : vector<9x9xf32>
    %cst_84 = arith.constant dense<0.000000e+00> : vector<9xf32>
    %160 = vector.multi_reduction <add>, %159, %cst_84 [1] : vector<9x9xf32> to vector<9xf32>
    %161 = vector.shape_cast %160 : vector<9xf32> to vector<9x1xf32>
    %162 = tpu.reciprocal %161 {approx = true} : vector<9x1xf32> -> vector<9x1xf32>
    %163 = arith.truncf %159 : vector<9x9xf32> to vector<9x9xbf16>
    %164 = arith.truncf %151 : vector<9x16xf32> to vector<9x16xbf16>
    %cst_85 = arith.constant dense<0.000000e+00> : vector<9x16xf32>
    %165 = tpu.matmul %163, %164, %cst_85 {dimension_numbers = #tpu.dot_dimension_numbers<[1], [0], [0], [1], [0, 0, 1, 1], [], []>} : vector<9x9xbf16>, vector<9x16xbf16>, vector<9x16xf32> -> vector<9x16xf32>
    %166 = vector.broadcast %162 : vector<9x1xf32> to vector<9x16xf32>
    %167 = arith.mulf %165, %166 : vector<9x16xf32>
    %c0_86 = arith.constant 0 : index
    %c0_87 = arith.constant 0 : index
    %168 = vector.load %arg21[%c0_86, %c0_87] : memref<9x32xf32, #tpu.memory_space<vmem>>, vector<9x16xf32>
    tpu.vector_store %arg21[%c0_86, %c0_87], %167 {strides = array<i32>} : memref<9x32xf32, #tpu.memory_space<vmem>>, vector<9x16xf32>,
    %169 = vector.extract_strided_slice %148 {offsets = [0, 16], sizes = [9, 16], strides = [1, 1]} : vector<9x96xf32> to vector<9x16xf32>
    %170 = vector.extract_strided_slice %148 {offsets = [0, 48], sizes = [9, 16], strides = [1, 1]} : vector<9x96xf32> to vector<9x16xf32>
    %171 = vector.extract_strided_slice %148 {offsets = [0, 80], sizes = [9, 16], strides = [1, 1]} : vector<9x96xf32> to vector<9x16xf32>
    %172 = arith.truncf %169 : vector<9x16xf32> to vector<9x16xbf16>
    %173 = arith.truncf %170 : vector<9x16xf32> to vector<9x16xbf16>
    %cst_88 = arith.constant dense<0.000000e+00> : vector<9x9xf32>
    %174 = tpu.matmul %172, %173, %cst_88 {dimension_numbers = #tpu.dot_dimension_numbers<[1], [1], [0], [0], [0, 0, 1, 0], [], []>} : vector<9x16xbf16>, vector<9x16xbf16>, vector<9x9xf32> -> vector<9x9xf32>
    %cst_89 = arith.constant dense<0xFF800000> : vector<9xf32>
    %175 = vector.multi_reduction <maximumf>, %174, %cst_89 [1] : vector<9x9xf32> to vector<9xf32>
    %176 = vector.shape_cast %175 : vector<9xf32> to vector<9x1xf32>
    %177 = vector.broadcast %176 : vector<9x1xf32> to vector<9x9xf32>
    %178 = arith.subf %174, %177 : vector<9x9xf32>
    %179 = math.exp %178 : vector<9x9xf32>
    %cst_90 = arith.constant dense<0.000000e+00> : vector<9xf32>
    %180 = vector.multi_reduction <add>, %179, %cst_90 [1] : vector<9x9xf32> to vector<9xf32>
    %181 = vector.shape_cast %180 : vector<9xf32> to vector<9x1xf32>
    %182 = tpu.reciprocal %181 {approx = true} : vector<9x1xf32> -> vector<9x1xf32>
    %183 = arith.truncf %179 : vector<9x9xf32> to vector<9x9xbf16>
    %184 = arith.truncf %171 : vector<9x16xf32> to vector<9x16xbf16>
    %cst_91 = arith.constant dense<0.000000e+00> : vector<9x16xf32>
    %185 = tpu.matmul %183, %184, %cst_91 {dimension_numbers = #tpu.dot_dimension_numbers<[1], [0], [0], [1], [0, 0, 1, 1], [], []>} : vector<9x9xbf16>, vector<9x16xbf16>, vector<9x16xf32> -> vector<9x16xf32>
    %186 = vector.broadcast %182 : vector<9x1xf32> to vector<9x16xf32>
    %187 = arith.mulf %185, %186 : vector<9x16xf32>
    %c0_92 = arith.constant 0 : index
    %c16_93 = arith.constant 16 : index
    %188 = vector.load %arg21[%c0_92, %c16_93] : memref<9x32xf32, #tpu.memory_space<vmem>>, vector<9x16xf32>
    tpu.vector_store %arg21[%c0_92, %c16_93], %187 {strides = array<i32>} : memref<9x32xf32, #tpu.memory_space<vmem>>, vector<9x16xf32>,
    %c0_94 = arith.constant 0 : index
    %c0_95 = arith.constant 0 : index
    %189 = vector.load %arg21[%c0_94, %c0_95] : memref<9x32xf32, #tpu.memory_space<vmem>>, vector<9x32xf32>
    %190 = arith.truncf %189 : vector<9x32xf32> to vector<9x32xbf16>
    %c1_96 = arith.constant 1 : index
    %c0_97 = arith.constant 0 : index
    %c0_98 = arith.constant 0 : index
    %191 = vector.load %arg7[%c1_96, %c0_97, %c0_98] : memref<2x32x32xbf16, #tpu.memory_space<vmem>>, vector<1x32x32xbf16>
    %192 = vector.shape_cast %191 : vector<1x32x32xbf16> to vector<32x32xbf16>
    %cst_99 = arith.constant dense<0.000000e+00> : vector<9x32xf32>
    %193 = tpu.matmul %190, %192, %cst_99 {dimension_numbers = #tpu.dot_dimension_numbers<[1], [0], [0], [1], [0, 0, 1, 1], [], []>} : vector<9x32xbf16>, vector<32x32xbf16>, vector<9x32xf32> -> vector<9x32xf32>
    %c1_100 = arith.constant 1 : index
    %c0_101 = arith.constant 0 : index
    %c0_102 = arith.constant 0 : index
    %194 = vector.load %arg8[%c1_100, %c0_101, %c0_102] : memref<2x1x32xf32, #tpu.memory_space<vmem>>, vector<1x1x32xf32>
    %195 = vector.shape_cast %194 : vector<1x1x32xf32> to vector<1x32xf32>
    %196 = vector.broadcast %195 : vector<1x32xf32> to vector<9x32xf32>
    %197 = arith.addf %193, %196 : vector<9x32xf32>
    %198 = arith.addf %197, %144 : vector<9x32xf32>
    %c1_103 = arith.constant 1 : index
    %c0_104 = arith.constant 0 : index
    %c0_105 = arith.constant 0 : index
    %199 = vector.load %arg9[%c1_103, %c0_104, %c0_105] : memref<2x1x32xf32, #tpu.memory_space<vmem>>, vector<1x1x32xf32>
    %200 = vector.shape_cast %199 : vector<1x1x32xf32> to vector<1x32xf32>
    %c1_106 = arith.constant 1 : index
    %c0_107 = arith.constant 0 : index
    %c0_108 = arith.constant 0 : index
    %201 = vector.load %arg10[%c1_106, %c0_107, %c0_108] : memref<2x1x32xf32, #tpu.memory_space<vmem>>, vector<1x1x32xf32>
    %202 = vector.shape_cast %201 : vector<1x1x32xf32> to vector<1x32xf32>
    %cst_109 = arith.constant dense<0.000000e+00> : vector<9xf32>
    %203 = vector.multi_reduction <add>, %198, %cst_109 [1] : vector<9x32xf32> to vector<9xf32>
    %204 = vector.shape_cast %203 : vector<9xf32> to vector<9x1xf32>
    %cst_110 = arith.constant 3.200000e+01 : f32
    %205 = vector.broadcast %cst_110 : f32 to vector<9x1xf32>
    %206 = arith.divf %204, %205 : vector<9x1xf32>
    %207 = vector.broadcast %206 : vector<9x1xf32> to vector<9x32xf32>
    %208 = arith.subf %198, %207 : vector<9x32xf32>
    %209 = arith.mulf %208, %208 : vector<9x32xf32>
    %cst_111 = arith.constant dense<0.000000e+00> : vector<9xf32>
    %210 = vector.multi_reduction <add>, %209, %cst_111 [1] : vector<9x32xf32> to vector<9xf32>
    %211 = vector.shape_cast %210 : vector<9xf32> to vector<9x1xf32>
    %cst_112 = arith.constant 3.200000e+01 : f32
    %212 = vector.broadcast %cst_112 : f32 to vector<9x1xf32>
    %213 = arith.divf %211, %212 : vector<9x1xf32>
    %214 = vector.broadcast %206 : vector<9x1xf32> to vector<9x32xf32>
    %215 = arith.subf %198, %214 : vector<9x32xf32>
    %cst_113 = arith.constant 9.99999974E-6 : f32
    %216 = vector.broadcast %cst_113 : f32 to vector<9x1xf32>
    %217 = arith.addf %213, %216 : vector<9x1xf32>
    %218 = math.rsqrt %217 : vector<9x1xf32>
    %219 = vector.broadcast %218 : vector<9x1xf32> to vector<9x32xf32>
    %220 = arith.mulf %215, %219 : vector<9x32xf32>
    %221 = vector.broadcast %200 : vector<1x32xf32> to vector<9x32xf32>
    %222 = arith.mulf %220, %221 : vector<9x32xf32>
    %223 = vector.broadcast %202 : vector<1x32xf32> to vector<9x32xf32>
    %224 = arith.addf %222, %223 : vector<9x32xf32>
    %225 = arith.truncf %224 : vector<9x32xf32> to vector<9x32xbf16>
    %c1_114 = arith.constant 1 : index
    %c0_115 = arith.constant 0 : index
    %c0_116 = arith.constant 0 : index
    %226 = vector.load %arg11[%c1_114, %c0_115, %c0_116] : memref<2x32x64xbf16, #tpu.memory_space<vmem>>, vector<1x32x64xbf16>
    %227 = vector.shape_cast %226 : vector<1x32x64xbf16> to vector<32x64xbf16>
    %cst_117 = arith.constant dense<0.000000e+00> : vector<9x64xf32>
    %228 = tpu.matmul %225, %227, %cst_117 {dimension_numbers = #tpu.dot_dimension_numbers<[1], [0], [0], [1], [0, 0, 1, 1], [], []>} : vector<9x32xbf16>, vector<32x64xbf16>, vector<9x64xf32> -> vector<9x64xf32>
    %c1_118 = arith.constant 1 : index
    %c0_119 = arith.constant 0 : index
    %c0_120 = arith.constant 0 : index
    %229 = vector.load %arg12[%c1_118, %c0_119, %c0_120] : memref<2x1x64xf32, #tpu.memory_space<vmem>>, vector<1x1x64xf32>
    %230 = vector.shape_cast %229 : vector<1x1x64xf32> to vector<1x64xf32>
    %231 = vector.broadcast %230 : vector<1x64xf32> to vector<9x64xf32>
    %232 = arith.addf %228, %231 : vector<9x64xf32>
    %cst_121 = arith.constant 5.000000e-01 : f32
    %233 = vector.broadcast %cst_121 : f32 to vector<9x64xf32>
    %234 = arith.mulf %233, %232 : vector<9x64xf32>
    %cst_122 = arith.constant 0.707106769 : f32
    %235 = vector.broadcast %cst_122 : f32 to vector<9x64xf32>
    %236 = arith.mulf %232, %235 : vector<9x64xf32>
    %237 = math.erf %236 : vector<9x64xf32>
    %cst_123 = arith.constant 1.000000e+00 : f32
    %238 = vector.broadcast %cst_123 : f32 to vector<9x64xf32>
    %239 = arith.addf %238, %237 : vector<9x64xf32>
    %240 = arith.mulf %234, %239 : vector<9x64xf32>
    %241 = arith.truncf %240 : vector<9x64xf32> to vector<9x64xbf16>
    %c1_124 = arith.constant 1 : index
    %c0_125 = arith.constant 0 : index
    %c0_126 = arith.constant 0 : index
    %242 = vector.load %arg13[%c1_124, %c0_125, %c0_126] : memref<2x64x32xbf16, #tpu.memory_space<vmem>>, vector<1x64x32xbf16>
    %243 = vector.shape_cast %242 : vector<1x64x32xbf16> to vector<64x32xbf16>
    %cst_127 = arith.constant dense<0.000000e+00> : vector<9x32xf32>
    %244 = tpu.matmul %241, %243, %cst_127 {dimension_numbers = #tpu.dot_dimension_numbers<[1], [0], [0], [1], [0, 0, 1, 1], [], []>} : vector<9x64xbf16>, vector<64x32xbf16>, vector<9x32xf32> -> vector<9x32xf32>
    %c1_128 = arith.constant 1 : index
    %c0_129 = arith.constant 0 : index
    %c0_130 = arith.constant 0 : index
    %245 = vector.load %arg14[%c1_128, %c0_129, %c0_130] : memref<2x1x32xf32, #tpu.memory_space<vmem>>, vector<1x1x32xf32>
    %246 = vector.shape_cast %245 : vector<1x1x32xf32> to vector<1x32xf32>
    %247 = vector.broadcast %246 : vector<1x32xf32> to vector<9x32xf32>
    %248 = arith.addf %244, %247 : vector<9x32xf32>
    %249 = arith.addf %248, %224 : vector<9x32xf32>
    %c1_131 = arith.constant 1 : index
    %c0_132 = arith.constant 0 : index
    %c0_133 = arith.constant 0 : index
    %250 = vector.load %arg15[%c1_131, %c0_132, %c0_133] : memref<2x1x32xf32, #tpu.memory_space<vmem>>, vector<1x1x32xf32>
    %251 = vector.shape_cast %250 : vector<1x1x32xf32> to vector<1x32xf32>
    %c1_134 = arith.constant 1 : index
    %c0_135 = arith.constant 0 : index
    %c0_136 = arith.constant 0 : index
    %252 = vector.load %arg16[%c1_134, %c0_135, %c0_136] : memref<2x1x32xf32, #tpu.memory_space<vmem>>, vector<1x1x32xf32>
    %253 = vector.shape_cast %252 : vector<1x1x32xf32> to vector<1x32xf32>
    %cst_137 = arith.constant dense<0.000000e+00> : vector<9xf32>
    %254 = vector.multi_reduction <add>, %249, %cst_137 [1] : vector<9x32xf32> to vector<9xf32>
    %255 = vector.shape_cast %254 : vector<9xf32> to vector<9x1xf32>
    %cst_138 = arith.constant 3.200000e+01 : f32
    %256 = vector.broadcast %cst_138 : f32 to vector<9x1xf32>
    %257 = arith.divf %255, %256 : vector<9x1xf32>
    %258 = vector.broadcast %257 : vector<9x1xf32> to vector<9x32xf32>
    %259 = arith.subf %249, %258 : vector<9x32xf32>
    %260 = arith.mulf %259, %259 : vector<9x32xf32>
    %cst_139 = arith.constant dense<0.000000e+00> : vector<9xf32>
    %261 = vector.multi_reduction <add>, %260, %cst_139 [1] : vector<9x32xf32> to vector<9xf32>
    %262 = vector.shape_cast %261 : vector<9xf32> to vector<9x1xf32>
    %cst_140 = arith.constant 3.200000e+01 : f32
    %263 = vector.broadcast %cst_140 : f32 to vector<9x1xf32>
    %264 = arith.divf %262, %263 : vector<9x1xf32>
    %265 = vector.broadcast %257 : vector<9x1xf32> to vector<9x32xf32>
    %266 = arith.subf %249, %265 : vector<9x32xf32>
    %cst_141 = arith.constant 9.99999974E-6 : f32
    %267 = vector.broadcast %cst_141 : f32 to vector<9x1xf32>
    %268 = arith.addf %264, %267 : vector<9x1xf32>
    %269 = math.rsqrt %268 : vector<9x1xf32>
    %270 = vector.broadcast %269 : vector<9x1xf32> to vector<9x32xf32>
    %271 = arith.mulf %266, %270 : vector<9x32xf32>
    %272 = vector.broadcast %251 : vector<1x32xf32> to vector<9x32xf32>
    %273 = arith.mulf %271, %272 : vector<9x32xf32>
    %274 = vector.broadcast %253 : vector<1x32xf32> to vector<9x32xf32>
    %275 = arith.addf %273, %274 : vector<9x32xf32>
    %cst_142 = arith.constant dense<0.000000e+00> : vector<32xf32>
    %276 = vector.multi_reduction <add>, %275, %cst_142 [0] : vector<9x32xf32> to vector<32xf32>
    %277 = vector.shape_cast %276 : vector<32xf32> to vector<1x32xf32>
    %cst_143 = arith.constant 9.000000e+00 : f32
    %278 = vector.broadcast %cst_143 : f32 to vector<1x32xf32>
    %279 = arith.divf %277, %278 : vector<1x32xf32>
    %280 = arith.truncf %279 : vector<1x32xf32> to vector<1x32xbf16>
    %c0_144 = arith.constant 0 : index
    %c0_145 = arith.constant 0 : index
    %281 = vector.load %arg17[%c0_144, %c0_145] : memref<32x12xbf16, #tpu.memory_space<vmem>>, vector<32x12xbf16>
    %cst_146 = arith.constant dense<0.000000e+00> : vector<1x12xf32>
    %282 = tpu.matmul %280, %281, %cst_146 {dimension_numbers = #tpu.dot_dimension_numbers<[1], [0], [0], [1], [0, 0, 1, 1], [], []>} : vector<1x32xbf16>, vector<32x12xbf16>, vector<1x12xf32> -> vector<1x12xf32>
    %c0_147 = arith.constant 0 : index
    %c0_148 = arith.constant 0 : index
    %283 = vector.load %arg18[%c0_147, %c0_148] : memref<1x12xf32, #tpu.memory_space<vmem>>, vector<1x12xf32>
    %284 = arith.addf %282, %283 : vector<1x12xf32>
    %c0_149 = arith.constant 0 : index
    %c0_150 = arith.constant 0 : index
    %c0_151 = arith.constant 0 : index
    %285 = vector.load %arg19[%c0_149, %c0_150, %c0_151] : memref<1x1x12xf32, #tpu.memory_space<vmem>>, vector<1x1x12xf32>
    %286 = vector.shape_cast %285 : vector<1x1x12xf32> to vector<1x12xf32>
    %287 = vector.shape_cast %284 : vector<1x12xf32> to vector<1x1x12xf32>
    tpu.vector_store %arg19[%c0_149, %c0_150, %c0_151], %287 {strides = array<i32>} : memref<1x1x12xf32, #tpu.memory_space<vmem>>, vector<1x1x12xf32>,
    return
  }
  func.func @transform_0(%arg0: i32) -> (i32, i32, i32) {
    %c0_i32 = arith.constant 0 : i32
    %c0_i32_0 = arith.constant 0 : i32
    %c0_i32_1 = arith.constant 0 : i32
    return %arg0, %c0_i32, %c0_i32_0 : i32, i32, i32
  }
  func.func @transform_1(%arg0: i32) -> (i32, i32) {
    %c0_i32 = arith.constant 0 : i32
    %c0_i32_0 = arith.constant 0 : i32
    %c0_i32_1 = arith.constant 0 : i32
    return %c0_i32, %c0_i32_0 : i32, i32
  }
  func.func @transform_2(%arg0: i32) -> (i32, i32) {
    %c0_i32 = arith.constant 0 : i32
    %c0_i32_0 = arith.constant 0 : i32
    %c0_i32_1 = arith.constant 0 : i32
    return %c0_i32, %c0_i32_0 : i32, i32
  }
  func.func @transform_3(%arg0: i32) -> (i32, i32) {
    %c0_i32 = arith.constant 0 : i32
    %c0_i32_0 = arith.constant 0 : i32
    %c0_i32_1 = arith.constant 0 : i32
    return %c0_i32, %c0_i32_0 : i32, i32
  }
  func.func @transform_4(%arg0: i32) -> (i32, i32) {
    %c0_i32 = arith.constant 0 : i32
    %c0_i32_0 = arith.constant 0 : i32
    %c0_i32_1 = arith.constant 0 : i32
    return %c0_i32, %c0_i32_0 : i32, i32
  }
  func.func @transform_5(%arg0: i32) -> (i32, i32, i32) {
    %c0_i32 = arith.constant 0 : i32
    %c0_i32_0 = arith.constant 0 : i32
    %c0_i32_1 = arith.constant 0 : i32
    %c0_i32_2 = arith.constant 0 : i32
    return %c0_i32, %c0_i32_0, %c0_i32_1 : i32, i32, i32
  }
  func.func @transform_6(%arg0: i32) -> (i32, i32, i32) {
    %c0_i32 = arith.constant 0 : i32
    %c0_i32_0 = arith.constant 0 : i32
    %c0_i32_1 = arith.constant 0 : i32
    %c0_i32_2 = arith.constant 0 : i32
    return %c0_i32, %c0_i32_0, %c0_i32_1 : i32, i32, i32
  }
  func.func @transform_7(%arg0: i32) -> (i32, i32, i32) {
    %c0_i32 = arith.constant 0 : i32
    %c0_i32_0 = arith.constant 0 : i32
    %c0_i32_1 = arith.constant 0 : i32
    %c0_i32_2 = arith.constant 0 : i32
    return %c0_i32, %c0_i32_0, %c0_i32_1 : i32, i32, i32
  }
  func.func @transform_8(%arg0: i32) -> (i32, i32, i32) {
    %c0_i32 = arith.constant 0 : i32
    %c0_i32_0 = arith.constant 0 : i32
    %c0_i32_1 = arith.constant 0 : i32
    %c0_i32_2 = arith.constant 0 : i32
    return %c0_i32, %c0_i32_0, %c0_i32_1 : i32, i32, i32
  }
  func.func @transform_9(%arg0: i32) -> (i32, i32, i32) {
    %c0_i32 = arith.constant 0 : i32
    %c0_i32_0 = arith.constant 0 : i32
    %c0_i32_1 = arith.constant 0 : i32
    %c0_i32_2 = arith.constant 0 : i32
    return %c0_i32, %c0_i32_0, %c0_i32_1 : i32, i32, i32
  }
  func.func @transform_10(%arg0: i32) -> (i32, i32, i32) {
    %c0_i32 = arith.constant 0 : i32
    %c0_i32_0 = arith.constant 0 : i32
    %c0_i32_1 = arith.constant 0 : i32
    %c0_i32_2 = arith.constant 0 : i32
    return %c0_i32, %c0_i32_0, %c0_i32_1 : i32, i32, i32
  }
  func.func @transform_11(%arg0: i32) -> (i32, i32, i32) {
    %c0_i32 = arith.constant 0 : i32
    %c0_i32_0 = arith.constant 0 : i32
    %c0_i32_1 = arith.constant 0 : i32
    %c0_i32_2 = arith.constant 0 : i32
    return %c0_i32, %c0_i32_0, %c0_i32_1 : i32, i32, i32
  }
  func.func @transform_12(%arg0: i32) -> (i32, i32, i32) {
    %c0_i32 = arith.constant 0 : i32
    %c0_i32_0 = arith.constant 0 : i32
    %c0_i32_1 = arith.constant 0 : i32
    %c0_i32_2 = arith.constant 0 : i32
    return %c0_i32, %c0_i32_0, %c0_i32_1 : i32, i32, i32
  }
  func.func @transform_13(%arg0: i32) -> (i32, i32, i32) {
    %c0_i32 = arith.constant 0 : i32
    %c0_i32_0 = arith.constant 0 : i32
    %c0_i32_1 = arith.constant 0 : i32
    %c0_i32_2 = arith.constant 0 : i32
    return %c0_i32, %c0_i32_0, %c0_i32_1 : i32, i32, i32
  }
  func.func @transform_14(%arg0: i32) -> (i32, i32, i32) {
    %c0_i32 = arith.constant 0 : i32
    %c0_i32_0 = arith.constant 0 : i32
    %c0_i32_1 = arith.constant 0 : i32
    %c0_i32_2 = arith.constant 0 : i32
    return %c0_i32, %c0_i32_0, %c0_i32_1 : i32, i32, i32
  }
  func.func @transform_15(%arg0: i32) -> (i32, i32, i32) {
    %c0_i32 = arith.constant 0 : i32
    %c0_i32_0 = arith.constant 0 : i32
    %c0_i32_1 = arith.constant 0 : i32
    %c0_i32_2 = arith.constant 0 : i32
    return %c0_i32, %c0_i32_0, %c0_i32_1 : i32, i32, i32
  }
  func.func @transform_16(%arg0: i32) -> (i32, i32) {
    %c0_i32 = arith.constant 0 : i32
    %c0_i32_0 = arith.constant 0 : i32
    %c0_i32_1 = arith.constant 0 : i32
    return %c0_i32, %c0_i32_0 : i32, i32
  }
  func.func @transform_17(%arg0: i32) -> (i32, i32) {
    %c0_i32 = arith.constant 0 : i32
    %c0_i32_0 = arith.constant 0 : i32
    %c0_i32_1 = arith.constant 0 : i32
    return %c0_i32, %c0_i32_0 : i32, i32
  }
  func.func @transform_18(%arg0: i32) -> (i32, i32, i32) {
    %c0_i32 = arith.constant 0 : i32
    %c0_i32_0 = arith.constant 0 : i32
    %c0_i32_1 = arith.constant 0 : i32
    return %arg0, %c0_i32, %c0_i32_0 : i32, i32, i32
  }
}

</mosaic_0001>

<llo_original>
// kernel: tpu_custom_call.1
$region0: #{tpu_custom_call.1}
  #allocation0 [shape = 'u32[]', space=smem, size = 0x4, offset = 0x4, fixed_abs, tag = 'smem constant byte address 0x4 - core index']
  #allocation1 [shape = 'u32[144,128]{1,0:T(1,128)}', space=vmem, size = 0x12000, scoped, tag = 'internal scratch']
  #allocation2 [shape = 'f32[9,32]{1,0:T(8,128)}', space=vmem, size = 0x2000, scoped, tag = 'scratch operand']
  #allocation3 [shape = 'f32[9,32]{1,0:T(8,128)}', space=vmem, size = 0x2000, scoped, tag = 'scratch operand']
  %s0 = inlined_call_operand.vmem [shape: f32[2,8,16], index: 0, kind: input, shape index: {}]
  %s1 = inlined_call_operand.vmem [shape: bf16[16,32], index: 1, kind: input, shape index: {}]
  %s2 = inlined_call_operand.vmem [shape: f32[1,32], index: 2, kind: input, shape index: {}]
  %s3 = inlined_call_operand.hbm [shape: f32[1,32], index: 3, kind: input, shape index: {}]
  %s4 = inlined_call_operand.hbm [shape: f32[8,32], index: 4, kind: input, shape index: {}]
  %s5 = inlined_call_operand.vmem [shape: bf16[2,32,96], index: 5, kind: input, shape index: {}]
  %s6 = inlined_call_operand.vmem [shape: bf16[2,32,32], index: 6, kind: input, shape index: {}]
  %s7 = inlined_call_operand.hbm [shape: f32[2,1,32], index: 7, kind: input, shape index: {}]
  %s8 = inlined_call_operand.hbm [shape: f32[2,1,32], index: 8, kind: input, shape index: {}]
  %s9 = inlined_call_operand.hbm [shape: f32[2,1,32], index: 9, kind: input, shape index: {}]
  %s10 = inlined_call_operand.vmem [shape: bf16[2,32,64], index: 10, kind: input, shape index: {}]
  %s11 = inlined_call_operand.hbm [shape: f32[2,1,64], index: 11, kind: input, shape index: {}]
  %s12 = inlined_call_operand.vmem [shape: bf16[2,64,32], index: 12, kind: input, shape index: {}]
  %s13 = inlined_call_operand.vmem [shape: f32[2,1,32], index: 13, kind: input, shape index: {}]
  %s14 = inlined_call_operand.vmem [shape: f32[2,1,32], index: 14, kind: input, shape index: {}]
  %s15 = inlined_call_operand.vmem [shape: f32[2,1,32], index: 15, kind: input, shape index: {}]
  %s16 = inlined_call_operand.vmem [shape: bf16[32,12], index: 16, kind: input, shape index: {}]
  %s17 = inlined_call_operand.vmem [shape: f32[1,12], index: 17, kind: input, shape index: {}]
  %s18 = inlined_call_operand.hbm [shape: f32[2,1,12], index: 18, kind: output, shape index: {}]
  %s19 = sld [smem:[#allocation0]]
  $region129: #{tpu_custom_call.1} parent=0
    _
  %s21 = ssub.s32 1, %s19
  %s22 = scalar_select 0, %s21, %s19
  $region1: #{tpu_custom_call.1} parent=0
    #allocation4 [shape = 'u8[512]{0}', space=vmem, size = 0x400, scoped, tag = 'input window, operand 3, single buffered']
    #allocation5 [shape = 's32[2]{0}', space=sflag, size = 0x8, scoped, tag = 'scoped memory for tpu_custom_call.1']
    #allocation6 [shape = 's32[2]{0}', space=sflag, size = 0x8, scoped, tag = 'scoped memory for tpu_custom_call.1']
    #allocation7 [shape = 'u8[4096]{0}', space=vmem, size = 0x1000, scoped, tag = 'input window, operand 4, single buffered']
    #allocation8 [shape = 's32[1]{0}', space=sflag, size = 0x4, scoped, tag = 'scoped memory for tpu_custom_call.1']
    #allocation9 [shape = 'u8[1024]{0}', space=vmem, size = 0x400, scoped, tag = 'input window, operand 7, single buffered']
    #allocation10 [shape = 'u8[1024]{0}', space=vmem, size = 0x400, scoped, tag = 'input window, operand 8, single buffered']
    #allocation11 [shape = 's32[1]{0}', space=sflag, size = 0x4, scoped, tag = 'scoped memory for tpu_custom_call.1']
    #allocation12 [shape = 'u8[1024]{0}', space=vmem, size = 0x400, scoped, tag = 'input window, operand 9, single buffered']
    #allocation13 [shape = 'u8[1024]{0}', space=vmem, size = 0x400, scoped, tag = 'input window, operand 11, single buffered']
    #allocation14 [shape = 's32[1]{0}', space=sflag, size = 0x4, scoped, tag = 'scoped memory for tpu_custom_call.1']
    #allocation15 [shape = 'u8[1024]{0}', space=vmem, size = 0x400, scoped, tag = 'output window, operand 0']
    %23 = vsyncpa [#allocation5], 0
    %24 = vsyncpa [#allocation8], 0
    %25 = vsyncpa [#allocation11], 0
    %26 = vsyncpa [#allocation14], 0
    %27 = vsyncpa [#allocation6], 0
    %s28 = scalar_lea.sflag [#allocation6], 1
    %29 = vsyncpa %s28, 0
    loop: start=0, step=1, limit=4
    $region2: #{tpu_custom_call.1} parent=1 // loop_pre_header
      _
    $region3: #{tpu_custom_call.1} parent=1 // loop_header
      %s31 = sphi 0, %s35
      %p32 = scmp.ge.s32.totalorder %s31, 4
      %s41 = sphi 0, %s43
      %s44 = sphi 0, %s41
      %s45 = sphi 0, %s44
      %s61 = sphi 0, %s45
      %s65 = sphi 0, %s65
      %s67 = sphi 0, %s65
      %s68 = sphi 0, %s67
      %s82 = sphi 0, %s68
      %s86 = sphi 0, %s86
      %s88 = sphi 0, %s86
      %s89 = sphi 0, %s88
      %s103 = sphi 0, %s89
      %s107 = sphi 0, %s107
      %s109 = sphi 0, %s107
      %s110 = sphi 0, %s109
      %s124 = sphi 0, %s110
      %s128 = sphi 0, %s128
      %s130 = sphi 0, %s128
      %s131 = sphi 0, %s130
      %s145 = sphi 0, %s131
      %s149 = sphi 0, %s149
      %s151 = sphi 0, %s149
      %s152 = sphi 0, %s151
      %s166 = sphi 0, %s152
      %s170 = sphi 0, %s170
      %s172 = sphi 0, %s170
      %s173 = sphi 0, %s172
      %s187 = sphi 0, %s173
      %s191 = sphi 0, %s191
      %s193 = sphi 0, %s191
      %s194 = sphi 0, %s193
      %s208 = sphi 0, %s194
      %s212 = sphi 0, %s212
      %s214 = sphi 0, %s212
      %s215 = sphi 0, %s214
      %s229 = sphi 0, %s215
      %s233 = sphi 0, %s233
      %s235 = sphi 0, %s233
      %s236 = sphi 0, %s235
      %s250 = sphi 0, %s236
      %s254 = sphi 0, %s254
      %s256 = sphi 0, %s254
      %s257 = sphi 0, %s256
      %s271 = sphi 0, %s257
      %s275 = sphi 0, %s275
      %s277 = sphi 0, %s275
      %s278 = sphi 0, %s277
      %s292 = sphi 0, %s278
      %s296 = sphi 0, %s296
      %s298 = sphi 0, %s296
      %s299 = sphi 0, %s298
      %s313 = sphi 0, %s299
      %s317 = sphi 0, %s317
      %s319 = sphi 0, %s317
      %s320 = sphi 0, %s319
      %s334 = sphi 0, %s320
      %s338 = sphi 0, %s338
      %s340 = sphi 0, %s338
      %s341 = sphi 0, %s340
      %s355 = sphi 0, %s341
      %s359 = sphi 0, %s359
      %s361 = sphi 0, %s359
      %s362 = sphi 0, %s361
      %s376 = sphi 0, %s362
      %s380 = sphi 0, %s380
      %s382 = sphi 0, %s380
      %s383 = sphi 0, %s382
      %s397 = sphi 0, %s383
      %s401 = sphi 0, %s401
      %s403 = sphi 0, %s401
      %s404 = sphi 0, %s403
      %s418 = sphi 0, %s404
      %s424 = sphi 0, %s426
      %s427 = sphi 0, %s424
      %s428 = sphi 0, %s427
      %s444 = sphi 0, %s428
    $region4: #{tpu_custom_call.1} parent=1 // loop_header_branch
      %34 = sbr.rel (%p32) target = $region8
    $region5: #{tpu_custom_call.1} parent=1 // loop_body
      %s36 = ssub.s32 %s31, 1
      %s37 = ssub.s32 %s31, 2
      %s38 = sadd.s32 %s31, 1
      %s39 = ssub.s32 %s31, %s38
      %p40 = scmp.eq.s32.totalorder %s39, 0
      %s42 = sadd.s32 %s41, 1
      %s43 = scalar_select %p40, %s41, %s42
      %p46 = pneg %p40
      %p47 = scmp.eq.s32.totalorder %s31, 1
      %p48 = por %p46, %p47
      %p49 = scmp.ne.s32.totalorder %s41, %s44
      %p50 = scmp.eq.s32.totalorder %s31, 0
      %p51 = por %p49, %p50
      %p52 = scmp.ne.s32.totalorder %s41, %s44
      %p53 = scmp.eq.s32.totalorder %s36, 1
      %p54 = por %p52, %p53
      %p55 = scmp.ne.s32.totalorder %s44, %s45
      %p56 = scmp.eq.s32.totalorder %s36, 0
      %p57 = por %p55, %p56
      %p58 = scmp.ne.s32.totalorder %s44, %s45
      %p59 = scmp.eq.s32.totalorder %s37, 1
      %p60 = por %p58, %p59
      %p62 = scmp.ne.s32.totalorder %s45, %s61
      %p63 = scmp.eq.s32.totalorder %s37, 0
      %p64 = por %p62, %p63
      %s66 = sadd.s32 %s65, 1
      %p69 = scmp.eq.s32.totalorder %s31, 1
      %p70 = scmp.ne.s32.totalorder %s65, %s67
      %p71 = scmp.eq.s32.totalorder %s31, 0
      %p72 = por %p70, %p71
      %p73 = scmp.ne.s32.totalorder %s65, %s67
      %p74 = scmp.eq.s32.totalorder %s36, 1
      %p75 = por %p73, %p74
      %p76 = scmp.ne.s32.totalorder %s67, %s68
      %p77 = scmp.eq.s32.totalorder %s36, 0
      %p78 = por %p76, %p77
      %p79 = scmp.ne.s32.totalorder %s67, %s68
      %p80 = scmp.eq.s32.totalorder %s37, 1
      %p81 = por %p79, %p80
      %p83 = scmp.ne.s32.totalorder %s68, %s82
      %p84 = scmp.eq.s32.totalorder %s37, 0
      %p85 = por %p83, %p84
      %s87 = sadd.s32 %s86, 1
      %p90 = scmp.eq.s32.totalorder %s31, 1
      %p91 = scmp.ne.s32.totalorder %s86, %s88
      %p92 = scmp.eq.s32.totalorder %s31, 0
      %p93 = por %p91, %p92
      %p94 = scmp.ne.s32.totalorder %s86, %s88
      %p95 = scmp.eq.s32.totalorder %s36, 1
      %p96 = por %p94, %p95
      %p97 = scmp.ne.s32.totalorder %s88, %s89
      %p98 = scmp.eq.s32.totalorder %s36, 0
      %p99 = por %p97, %p98
      %p100 = scmp.ne.s32.totalorder %s88, %s89
      %p101 = scmp.eq.s32.totalorder %s37, 1
      %p102 = por %p100, %p101
      %p104 = scmp.ne.s32.totalorder %s89, %s103
      %p105 = scmp.eq.s32.totalorder %s37, 0
      %p106 = por %p104, %p105
      %s108 = sadd.s32 %s107, 1
      %p111 = scmp.eq.s32.totalorder %s31, 1
      %p112 = scmp.ne.s32.totalorder %s107, %s109
      %p113 = scmp.eq.s32.totalorder %s31, 0
      %p114 = por %p112, %p113
      %p115 = scmp.ne.s32.totalorder %s107, %s109
      %p116 = scmp.eq.s32.totalorder %s36, 1
      %p117 = por %p115, %p116
      %p118 = scmp.ne.s32.totalorder %s109, %s110
      %p119 = scmp.eq.s32.totalorder %s36, 0
      %p120 = por %p118, %p119
      %p121 = scmp.ne.s32.totalorder %s109, %s110
      %p122 = scmp.eq.s32.totalorder %s37, 1
      %p123 = por %p121, %p122
      %p125 = scmp.ne.s32.totalorder %s110, %s124
      %p126 = scmp.eq.s32.totalorder %s37, 0
      %p127 = por %p125, %p126
      %s129 = sadd.s32 %s128, 1
      %p132 = scmp.eq.s32.totalorder %s31, 1
      %p133 = scmp.ne.s32.totalorder %s128, %s130
      %p134 = scmp.eq.s32.totalorder %s31, 0
      %p135 = por %p133, %p134
      %p136 = scmp.ne.s32.totalorder %s128, %s130
      %p137 = scmp.eq.s32.totalorder %s36, 1
      %p138 = por %p136, %p137
      %p139 = scmp.ne.s32.totalorder %s130, %s131
      %p140 = scmp.eq.s32.totalorder %s36, 0
      %p141 = por %p139, %p140
      %p142 = scmp.ne.s32.totalorder %s130, %s131
      %p143 = scmp.eq.s32.totalorder %s37, 1
      %p144 = por %p142, %p143
      %p146 = scmp.ne.s32.totalorder %s131, %s145
      %p147 = scmp.eq.s32.totalorder %s37, 0
      %p148 = por %p146, %p147
      %s150 = sadd.s32 %s149, 1
      %p153 = scmp.eq.s32.totalorder %s31, 1
      %p154 = scmp.ne.s32.totalorder %s149, %s151
      %p155 = scmp.eq.s32.totalorder %s31, 0
      %p156 = por %p154, %p155
      %p157 = scmp.ne.s32.totalorder %s149, %s151
      %p158 = scmp.eq.s32.totalorder %s36, 1
      %p159 = por %p157, %p158
      %p160 = scmp.ne.s32.totalorder %s151, %s152
      %p161 = scmp.eq.s32.totalorder %s36, 0
      %p162 = por %p160, %p161
      %p163 = scmp.ne.s32.totalorder %s151, %s152
      %p164 = scmp.eq.s32.totalorder %s37, 1
      %p165 = por %p163, %p164
      %p167 = scmp.ne.s32.totalorder %s152, %s166
      %p168 = scmp.eq.s32.totalorder %s37, 0
      %p169 = por %p167, %p168
      %s171 = sadd.s32 %s170, 1
      %p174 = scmp.eq.s32.totalorder %s31, 1
      %p175 = scmp.ne.s32.totalorder %s170, %s172
      %p176 = scmp.eq.s32.totalorder %s31, 0
      %p177 = por %p175, %p176
      %p178 = scmp.ne.s32.totalorder %s170, %s172
      %p179 = scmp.eq.s32.totalorder %s36, 1
      %p180 = por %p178, %p179
      %p181 = scmp.ne.s32.totalorder %s172, %s173
      %p182 = scmp.eq.s32.totalorder %s36, 0
      %p183 = por %p181, %p182
      %p184 = scmp.ne.s32.totalorder %s172, %s173
      %p185 = scmp.eq.s32.totalorder %s37, 1
      %p186 = por %p184, %p185
      %p188 = scmp.ne.s32.totalorder %s173, %s187
      %p189 = scmp.eq.s32.totalorder %s37, 0
      %p190 = por %p188, %p189
      %s192 = sadd.s32 %s191, 1
      %p195 = scmp.eq.s32.totalorder %s31, 1
      %p196 = scmp.ne.s32.totalorder %s191, %s193
      %p197 = scmp.eq.s32.totalorder %s31, 0
      %p198 = por %p196, %p197
      %p199 = scmp.ne.s32.totalorder %s191, %s193
      %p200 = scmp.eq.s32.totalorder %s36, 1
      %p201 = por %p199, %p200
      %p202 = scmp.ne.s32.totalorder %s193, %s194
      %p203 = scmp.eq.s32.totalorder %s36, 0
      %p204 = por %p202, %p203
      %p205 = scmp.ne.s32.totalorder %s193, %s194
      %p206 = scmp.eq.s32.totalorder %s37, 1
      %p207 = por %p205, %p206
      %p209 = scmp.ne.s32.totalorder %s194, %s208
      %p210 = scmp.eq.s32.totalorder %s37, 0
      %p211 = por %p209, %p210
      %s213 = sadd.s32 %s212, 1
      %p216 = scmp.eq.s32.totalorder %s31, 1
      %p217 = scmp.ne.s32.totalorder %s212, %s214
      %p218 = scmp.eq.s32.totalorder %s31, 0
      %p219 = por %p217, %p218
      %p220 = scmp.ne.s32.totalorder %s212, %s214
      %p221 = scmp.eq.s32.totalorder %s36, 1
      %p222 = por %p220, %p221
      %p223 = scmp.ne.s32.totalorder %s214, %s215
      %p224 = scmp.eq.s32.totalorder %s36, 0
      %p225 = por %p223, %p224
      %p226 = scmp.ne.s32.totalorder %s214, %s215
      %p227 = scmp.eq.s32.totalorder %s37, 1
      %p228 = por %p226, %p227
      %p230 = scmp.ne.s32.totalorder %s215, %s229
      %p231 = scmp.eq.s32.totalorder %s37, 0
      %p232 = por %p230, %p231
      %s234 = sadd.s32 %s233, 1
      %p237 = scmp.eq.s32.totalorder %s31, 1
      %p238 = scmp.ne.s32.totalorder %s233, %s235
      %p239 = scmp.eq.s32.totalorder %s31, 0
      %p240 = por %p238, %p239
      %p241 = scmp.ne.s32.totalorder %s233, %s235
      %p242 = scmp.eq.s32.totalorder %s36, 1
      %p243 = por %p241, %p242
      %p244 = scmp.ne.s32.totalorder %s235, %s236
      %p245 = scmp.eq.s32.totalorder %s36, 0
      %p246 = por %p244, %p245
      %p247 = scmp.ne.s32.totalorder %s235, %s236
      %p248 = scmp.eq.s32.totalorder %s37, 1
      %p249 = por %p247, %p248
      %p251 = scmp.ne.s32.totalorder %s236, %s250
      %p252 = scmp.eq.s32.totalorder %s37, 0
      %p253 = por %p251, %p252
      %s255 = sadd.s32 %s254, 1
      %p258 = scmp.eq.s32.totalorder %s31, 1
      %p259 = scmp.ne.s32.totalorder %s254, %s256
      %p260 = scmp.eq.s32.totalorder %s31, 0
      %p261 = por %p259, %p260
      %p262 = scmp.ne.s32.totalorder %s254, %s256
      %p263 = scmp.eq.s32.totalorder %s36, 1
      %p264 = por %p262, %p263
      %p265 = scmp.ne.s32.totalorder %s256, %s257
      %p266 = scmp.eq.s32.totalorder %s36, 0
      %p267 = por %p265, %p266
      %p268 = scmp.ne.s32.totalorder %s256, %s257
      %p269 = scmp.eq.s32.totalorder %s37, 1
      %p270 = por %p268, %p269
      %p272 = scmp.ne.s32.totalorder %s257, %s271
      %p273 = scmp.eq.s32.totalorder %s37, 0
      %p274 = por %p272, %p273
      %s276 = sadd.s32 %s275, 1
      %p279 = scmp.eq.s32.totalorder %s31, 1
      %p280 = scmp.ne.s32.totalorder %s275, %s277
      %p281 = scmp.eq.s32.totalorder %s31, 0
      %p282 = por %p280, %p281
      %p283 = scmp.ne.s32.totalorder %s275, %s277
      %p284 = scmp.eq.s32.totalorder %s36, 1
      %p285 = por %p283, %p284
      %p286 = scmp.ne.s32.totalorder %s277, %s278
      %p287 = scmp.eq.s32.totalorder %s36, 0
      %p288 = por %p286, %p287
      %p289 = scmp.ne.s32.totalorder %s277, %s278
      %p290 = scmp.eq.s32.totalorder %s37, 1
      %p291 = por %p289, %p290
      %p293 = scmp.ne.s32.totalorder %s278, %s292
      %p294 = scmp.eq.s32.totalorder %s37, 0
      %p295 = por %p293, %p294
      %s297 = sadd.s32 %s296, 1
      %p300 = scmp.eq.s32.totalorder %s31, 1
      %p301 = scmp.ne.s32.totalorder %s296, %s298
      %p302 = scmp.eq.s32.totalorder %s31, 0
      %p303 = por %p301, %p302
      %p304 = scmp.ne.s32.totalorder %s296, %s298
      %p305 = scmp.eq.s32.totalorder %s36, 1
      %p306 = por %p304, %p305
      %p307 = scmp.ne.s32.totalorder %s298, %s299
      %p308 = scmp.eq.s32.totalorder %s36, 0
      %p309 = por %p307, %p308
      %p310 = scmp.ne.s32.totalorder %s298, %s299
      %p311 = scmp.eq.s32.totalorder %s37, 1
      %p312 = por %p310, %p311
      %p314 = scmp.ne.s32.totalorder %s299, %s313
      %p315 = scmp.eq.s32.totalorder %s37, 0
      %p316 = por %p314, %p315
      %s318 = sadd.s32 %s317, 1
      %p321 = scmp.eq.s32.totalorder %s31, 1
      %p322 = scmp.ne.s32.totalorder %s317, %s319
      %p323 = scmp.eq.s32.totalorder %s31, 0
      %p324 = por %p322, %p323
      %p325 = scmp.ne.s32.totalorder %s317, %s319
      %p326 = scmp.eq.s32.totalorder %s36, 1
      %p327 = por %p325, %p326
      %p328 = scmp.ne.s32.totalorder %s319, %s320
      %p329 = scmp.eq.s32.totalorder %s36, 0
      %p330 = por %p328, %p329
      %p331 = scmp.ne.s32.totalorder %s319, %s320
      %p332 = scmp.eq.s32.totalorder %s37, 1
      %p333 = por %p331, %p332
      %p335 = scmp.ne.s32.totalorder %s320, %s334
      %p336 = scmp.eq.s32.totalorder %s37, 0
      %p337 = por %p335, %p336
      %s339 = sadd.s32 %s338, 1
      %p342 = scmp.eq.s32.totalorder %s31, 1
      %p343 = scmp.ne.s32.totalorder %s338, %s340
      %p344 = scmp.eq.s32.totalorder %s31, 0
      %p345 = por %p343, %p344
      %p346 = scmp.ne.s32.totalorder %s338, %s340
      %p347 = scmp.eq.s32.totalorder %s36, 1
      %p348 = por %p346, %p347
      %p349 = scmp.ne.s32.totalorder %s340, %s341
      %p350 = scmp.eq.s32.totalorder %s36, 0
      %p351 = por %p349, %p350
      %p352 = scmp.ne.s32.totalorder %s340, %s341
      %p353 = scmp.eq.s32.totalorder %s37, 1
      %p354 = por %p352, %p353
      %p356 = scmp.ne.s32.totalorder %s341, %s355
      %p357 = scmp.eq.s32.totalorder %s37, 0
      %p358 = por %p356, %p357
      %s360 = sadd.s32 %s359, 1
      %p363 = scmp.eq.s32.totalorder %s31, 1
      %p364 = scmp.ne.s32.totalorder %s359, %s361
      %p365 = scmp.eq.s32.totalorder %s31, 0
      %p366 = por %p364, %p365
      %p367 = scmp.ne.s32.totalorder %s359, %s361
      %p368 = scmp.eq.s32.totalorder %s36, 1
      %p369 = por %p367, %p368
      %p370 = scmp.ne.s32.totalorder %s361, %s362
      %p371 = scmp.eq.s32.totalorder %s36, 0
      %p372 = por %p370, %p371
      %p373 = scmp.ne.s32.totalorder %s361, %s362
      %p374 = scmp.eq.s32.totalorder %s37, 1
      %p375 = por %p373, %p374
      %p377 = scmp.ne.s32.totalorder %s362, %s376
      %p378 = scmp.eq.s32.totalorder %s37, 0
      %p379 = por %p377, %p378
      %s381 = sadd.s32 %s380, 1
      %p384 = scmp.eq.s32.totalorder %s31, 1
      %p385 = scmp.ne.s32.totalorder %s380, %s382
      %p386 = scmp.eq.s32.totalorder %s31, 0
      %p387 = por %p385, %p386
      %p388 = scmp.ne.s32.totalorder %s380, %s382
      %p389 = scmp.eq.s32.totalorder %s36, 1
      %p390 = por %p388, %p389
      %p391 = scmp.ne.s32.totalorder %s382, %s383
      %p392 = scmp.eq.s32.totalorder %s36, 0
      %p393 = por %p391, %p392
      %p394 = scmp.ne.s32.totalorder %s382, %s383
      %p395 = scmp.eq.s32.totalorder %s37, 1
      %p396 = por %p394, %p395
      %p398 = scmp.ne.s32.totalorder %s383, %s397
      %p399 = scmp.eq.s32.totalorder %s37, 0
      %p400 = por %p398, %p399
      %s402 = sadd.s32 %s401, 1
      %p405 = scmp.eq.s32.totalorder %s31, 1
      %p406 = scmp.ne.s32.totalorder %s401, %s403
      %p407 = scmp.eq.s32.totalorder %s31, 0
      %p408 = por %p406, %p407
      %p409 = scmp.ne.s32.totalorder %s401, %s403
      %p410 = scmp.eq.s32.totalorder %s36, 1
      %p411 = por %p409, %p410
      %p412 = scmp.ne.s32.totalorder %s403, %s404
      %p413 = scmp.eq.s32.totalorder %s36, 0
      %p414 = por %p412, %p413
      %p415 = scmp.ne.s32.totalorder %s403, %s404
      %p416 = scmp.eq.s32.totalorder %s37, 1
      %p417 = por %p415, %p416
      %p419 = scmp.ne.s32.totalorder %s404, %s418
      %p420 = scmp.eq.s32.totalorder %s37, 0
      %p421 = por %p419, %p420
      %s422 = ssub.s32 %s31, %s38
      %p423 = scmp.eq.s32.totalorder %s422, 0
      %s425 = sadd.s32 %s424, 1
      %s426 = scalar_select %p423, %s424, %s425
      %p429 = pneg %p423
      %p430 = scmp.eq.s32.totalorder %s31, 1
      %p431 = por %p429, %p430
      %p432 = scmp.ne.s32.totalorder %s424, %s427
      %p433 = scmp.eq.s32.totalorder %s31, 0
      %p434 = por %p432, %p433
      %p435 = scmp.ne.s32.totalorder %s424, %s427
      %p436 = scmp.eq.s32.totalorder %s36, 1
      %p437 = por %p435, %p436
      %p438 = scmp.ne.s32.totalorder %s427, %s428
      %p439 = scmp.eq.s32.totalorder %s36, 0
      %p440 = por %p438, %p439
      %p441 = scmp.ne.s32.totalorder %s427, %s428
      %p442 = scmp.eq.s32.totalorder %s37, 1
      %p443 = por %p441, %p442
      %p445 = scmp.ne.s32.totalorder %s428, %s444
      %p446 = scmp.eq.s32.totalorder %s37, 0
      %p447 = por %p445, %p446
      %p448 = scmp.le.s32.totalorder 1, %s31
      %p449 = scmp.lt.s32.totalorder %s31, 3
      %p450 = pnand %p448, %p449
      %p451 = pneg %p450
      // Predicated region
      $region9: #{tpu_custom_call.1} parent=5 // pred_check
        _
      $region10: #{tpu_custom_call.1} parent=5 // pred_check_branch
        %453 = sbr.rel (%p450) target = $region12
      $region11: #{tpu_custom_call.1} parent=5 // pred_region
        %s454 = ssub.s32 %s31, 1
        // Predicated region
        $region13: #{tpu_custom_call.1} parent=11 // pred_check
          %p455 = pneg %p78
        $region14: #{tpu_custom_call.1} parent=11 // pred_check_branch
          %457 = sbr.rel (%p455) target = $region16
        $region15: #{tpu_custom_call.1} parent=11 // pred_region
          _
        $region16: #{tpu_custom_call.1} parent=11 // pred_fallthru
          _
        // Predicated region
        $region17: #{tpu_custom_call.1} parent=11 // pred_check
          %p458 = pneg %p99
        $region18: #{tpu_custom_call.1} parent=11 // pred_check_branch
          %460 = sbr.rel (%p458) target = $region20
        $region19: #{tpu_custom_call.1} parent=11 // pred_region
          _
        $region20: #{tpu_custom_call.1} parent=11 // pred_fallthru
          _
        // Predicated region
        $region21: #{tpu_custom_call.1} parent=11 // pred_check
          %p461 = pneg %p120
        $region22: #{tpu_custom_call.1} parent=11 // pred_check_branch
          %463 = sbr.rel (%p461) target = $region24
        $region23: #{tpu_custom_call.1} parent=11 // pred_region
          %s465 = ssub.s32 16, 16
          %466 = vsyncadd [#allocation5], %s465
          %s468 = sshll.u32 [#allocation4], 4
          %s469 = int_to_ptr.vmem [resolvable:$true] %s468
          %471 = dma.hbm_to_vmem [thread:$0]  %s3, 16, %s469, [#allocation5]
        $region24: #{tpu_custom_call.1} parent=11 // pred_fallthru
          _
        // Predicated region
        $region25: #{tpu_custom_call.1} parent=11 // pred_check
          %p472 = pneg %p141
        $region26: #{tpu_custom_call.1} parent=11 // pred_check_branch
          %474 = sbr.rel (%p472) target = $region28
        $region27: #{tpu_custom_call.1} parent=11 // pred_region
          %s476 = ssub.s32 128, 128
          %477 = vsyncadd [#allocation8], %s476
          %s479 = sshll.u32 [#allocation7], 4
          %s480 = int_to_ptr.vmem [resolvable:$true] %s479
          %482 = dma.hbm_to_vmem [thread:$0]  %s4, 128, %s480, [#allocation8]
        $region28: #{tpu_custom_call.1} parent=11 // pred_fallthru
          _
        // Predicated region
        $region29: #{tpu_custom_call.1} parent=11 // pred_check
          %p483 = pneg %p162
        $region30: #{tpu_custom_call.1} parent=11 // pred_check_branch
          %485 = sbr.rel (%p483) target = $region32
        $region31: #{tpu_custom_call.1} parent=11 // pred_region
          _
        $region32: #{tpu_custom_call.1} parent=11 // pred_fallthru
          _
        // Predicated region
        $region33: #{tpu_custom_call.1} parent=11 // pred_check
          %p486 = pneg %p183
        $region34: #{tpu_custom_call.1} parent=11 // pred_check_branch
          %488 = sbr.rel (%p486) target = $region36
        $region35: #{tpu_custom_call.1} parent=11 // pred_region
          _
        $region36: #{tpu_custom_call.1} parent=11 // pred_fallthru
          _
        // Predicated region
        $region37: #{tpu_custom_call.1} parent=11 // pred_check
          %p489 = pneg %p204
        $region38: #{tpu_custom_call.1} parent=11 // pred_check_branch
          %491 = sbr.rel (%p489) target = $region40
        $region39: #{tpu_custom_call.1} parent=11 // pred_region
          %s493 = ssub.s32 32, 32
          %494 = vsyncadd [#allocation8], %s493
          %s495 = sshll.u32 [#allocation9], 4
          %s496 = int_to_ptr.vmem [resolvable:$true] %s495
          %501 = dma.hbm_to_vmem [thread:$0]  %s7, 32, %s496, [#allocation8], 16, 16, 1
        $region40: #{tpu_custom_call.1} parent=11 // pred_fallthru
          _
        // Predicated region
        $region41: #{tpu_custom_call.1} parent=11 // pred_check
          %p502 = pneg %p225
        $region42: #{tpu_custom_call.1} parent=11 // pred_check_branch
          %504 = sbr.rel (%p502) target = $region44
        $region43: #{tpu_custom_call.1} parent=11 // pred_region
          %s506 = ssub.s32 32, 32
          %507 = vsyncadd [#allocation11], %s506
          %s508 = sshll.u32 [#allocation10], 4
          %s509 = int_to_ptr.vmem [resolvable:$true] %s508
          %514 = dma.hbm_to_vmem [thread:$0]  %s8, 32, %s509, [#allocation11], 16, 16, 1
        $region44: #{tpu_custom_call.1} parent=11 // pred_fallthru
          _
        // Predicated region
        $region45: #{tpu_custom_call.1} parent=11 // pred_check
          %p515 = pneg %p246
        $region46: #{tpu_custom_call.1} parent=11 // pred_check_branch
          %517 = sbr.rel (%p515) target = $region48
        $region47: #{tpu_custom_call.1} parent=11 // pred_region
          %s519 = ssub.s32 32, 32
          %520 = vsyncadd [#allocation11], %s519
          %s521 = sshll.u32 [#allocation12], 4
          %s522 = int_to_ptr.vmem [resolvable:$true] %s521
          %527 = dma.hbm_to_vmem [thread:$0]  %s9, 32, %s522, [#allocation11], 16, 16, 1
        $region48: #{tpu_custom_call.1} parent=11 // pred_fallthru
          _
        // Predicated region
        $region49: #{tpu_custom_call.1} parent=11 // pred_check
          %p528 = pneg %p267
        $region50: #{tpu_custom_call.1} parent=11 // pred_check_branch
          %530 = sbr.rel (%p528) target = $region52
        $region51: #{tpu_custom_call.1} parent=11 // pred_region
          _
        $region52: #{tpu_custom_call.1} parent=11 // pred_fallthru
          _
        // Predicated region
        $region53: #{tpu_custom_call.1} parent=11 // pred_check
          %p531 = pneg %p288
        $region54: #{tpu_custom_call.1} parent=11 // pred_check_branch
          %533 = sbr.rel (%p531) target = $region56
        $region55: #{tpu_custom_call.1} parent=11 // pred_region
          %s535 = ssub.s32 32, 32
          %536 = vsyncadd [#allocation14], %s535
          %s537 = sshll.u32 [#allocation13], 4
          %s538 = int_to_ptr.vmem [resolvable:$true] %s537
          %543 = dma.hbm_to_vmem [thread:$0]  %s11, 32, %s538, [#allocation14], 16, 16, 1
        $region56: #{tpu_custom_call.1} parent=11 // pred_fallthru
          _
        // Predicated region
        $region57: #{tpu_custom_call.1} parent=11 // pred_check
          %p544 = pneg %p309
        $region58: #{tpu_custom_call.1} parent=11 // pred_check_branch
          %546 = sbr.rel (%p544) target = $region60
        $region59: #{tpu_custom_call.1} parent=11 // pred_region
          _
        $region60: #{tpu_custom_call.1} parent=11 // pred_fallthru
          _
        // Predicated region
        $region61: #{tpu_custom_call.1} parent=11 // pred_check
          %p547 = pneg %p330
        $region62: #{tpu_custom_call.1} parent=11 // pred_check_branch
          %549 = sbr.rel (%p547) target = $region64
        $region63: #{tpu_custom_call.1} parent=11 // pred_region
          _
        $region64: #{tpu_custom_call.1} parent=11 // pred_fallthru
          _
        // Predicated region
        $region65: #{tpu_custom_call.1} parent=11 // pred_check
          %p550 = pneg %p351
        $region66: #{tpu_custom_call.1} parent=11 // pred_check_branch
          %552 = sbr.rel (%p550) target = $region68
        $region67: #{tpu_custom_call.1} parent=11 // pred_region
          _
        $region68: #{tpu_custom_call.1} parent=11 // pred_fallthru
          _
        // Predicated region
        $region69: #{tpu_custom_call.1} parent=11 // pred_check
          %p553 = pneg %p372
        $region70: #{tpu_custom_call.1} parent=11 // pred_check_branch
          %555 = sbr.rel (%p553) target = $region72
        $region71: #{tpu_custom_call.1} parent=11 // pred_region
          _
        $region72: #{tpu_custom_call.1} parent=11 // pred_fallthru
          _
        // Predicated region
        $region73: #{tpu_custom_call.1} parent=11 // pred_check
          %p556 = pneg %p393
        $region74: #{tpu_custom_call.1} parent=11 // pred_check_branch
          %558 = sbr.rel (%p556) target = $region76
        $region75: #{tpu_custom_call.1} parent=11 // pred_region
          _
        $region76: #{tpu_custom_call.1} parent=11 // pred_fallthru
          _
        // Predicated region
        $region77: #{tpu_custom_call.1} parent=11 // pred_check
          %p559 = pneg %p414
        $region78: #{tpu_custom_call.1} parent=11 // pred_check_branch
          %561 = sbr.rel (%p559) target = $region80
        $region79: #{tpu_custom_call.1} parent=11 // pred_region
          _
        $region80: #{tpu_custom_call.1} parent=11 // pred_fallthru
          _
      $region12: #{tpu_custom_call.1} parent=5 // pred_fallthru
        _
      %p562 = scmp.lt.s32.totalorder %s31, 2
      // Predicated region
      $region81: #{tpu_custom_call.1} parent=5 // pred_check
        %p563 = pneg %p562
      $region82: #{tpu_custom_call.1} parent=5 // pred_check_branch
        %565 = sbr.rel (%p563) target = $region84
      $region83: #{tpu_custom_call.1} parent=5 // pred_region
        // Predicated region
        $region85: #{tpu_custom_call.1} parent=83 // pred_check
          %p566 = pneg %p51
        $region86: #{tpu_custom_call.1} parent=83 // pred_check_branch
          %568 = sbr.rel (%p566) target = $region88
        $region87: #{tpu_custom_call.1} parent=83 // pred_region
          %p569 = scmp.lt.s32.totalorder %s31, 1
          %s570 = scalar_select %p569, %s31, 1
          %s571 = smul.addr %s570, 8
          %s572 = scalar_lea.vmem %s0, %s571
        $region88: #{tpu_custom_call.1} parent=83 // pred_fallthru
          _
      $region84: #{tpu_custom_call.1} parent=5 // pred_fallthru
        _
      %p573 = scmp.le.s32.totalorder 1, %s31
      %p574 = scmp.lt.s32.totalorder %s31, 3
      %p575 = pnand %p573, %p574
      %p576 = pneg %p575
      // Predicated region
      $region89: #{tpu_custom_call.1} parent=5 // pred_check
        _
      $region90: #{tpu_custom_call.1} parent=5 // pred_check_branch
        %578 = sbr.rel (%p575) target = $region92
      $region91: #{tpu_custom_call.1} parent=5 // pred_region
        %s579 = ssub.s32 %s31, 1
        // Predicated region
        $region93: #{tpu_custom_call.1} parent=91 // pred_check
          %p580 = pneg %p120
        $region94: #{tpu_custom_call.1} parent=91 // pred_check_branch
          %582 = sbr.rel (%p580) target = $region96
        $region95: #{tpu_custom_call.1} parent=91 // pred_region
          %583 = dma.done [#allocation5], 16
        $region96: #{tpu_custom_call.1} parent=91 // pred_fallthru
          _
        // Predicated region
        $region97: #{tpu_custom_call.1} parent=91 // pred_check
          %p584 = pneg %p141
        $region98: #{tpu_custom_call.1} parent=91 // pred_check_branch
          %586 = sbr.rel (%p584) target = $region100
        $region99: #{tpu_custom_call.1} parent=91 // pred_region
          %587 = dma.done [#allocation8], 128
        $region100: #{tpu_custom_call.1} parent=91 // pred_fallthru
          _
        // Predicated region
        $region101: #{tpu_custom_call.1} parent=91 // pred_check
          %p588 = pneg %p204
        $region102: #{tpu_custom_call.1} parent=91 // pred_check_branch
          %590 = sbr.rel (%p588) target = $region104
        $region103: #{tpu_custom_call.1} parent=91 // pred_region
          %591 = dma.done [#allocation8], 32
        $region104: #{tpu_custom_call.1} parent=91 // pred_fallthru
          _
        // Predicated region
        $region105: #{tpu_custom_call.1} parent=91 // pred_check
          %p592 = pneg %p225
        $region106: #{tpu_custom_call.1} parent=91 // pred_check_branch
          %594 = sbr.rel (%p592) target = $region108
        $region107: #{tpu_custom_call.1} parent=91 // pred_region
          %595 = dma.done [#allocation11], 32
        $region108: #{tpu_custom_call.1} parent=91 // pred_fallthru
          _
        // Predicated region
        $region109: #{tpu_custom_call.1} parent=91 // pred_check
          %p596 = pneg %p246
        $region110: #{tpu_custom_call.1} parent=91 // pred_check_branch
          %598 = sbr.rel (%p596) target = $region112
        $region111: #{tpu_custom_call.1} parent=91 // pred_region
          %599 = dma.done [#allocation11], 32
        $region112: #{tpu_custom_call.1} parent=91 // pred_fallthru
          _
        // Predicated region
        $region113: #{tpu_custom_call.1} parent=91 // pred_check
          %p600 = pneg %p288
        $region114: #{tpu_custom_call.1} parent=91 // pred_check_branch
          %602 = sbr.rel (%p600) target = $region116
        $region115: #{tpu_custom_call.1} parent=91 // pred_region
          %603 = dma.done [#allocation14], 32
        $region116: #{tpu_custom_call.1} parent=91 // pred_fallthru
          _
        %p604 = scmp.lt.s32.totalorder %s36, 1
        %s605 = scalar_select %p604, %s36, 1
        %s606 = smul.addr %s605, 8
        %s607 = scalar_lea.vmem %s0, %s606
        %p608 = pneg %p57
        %p609 = pneg %p54
        %p610 = pneg %p78
        %p611 = pneg %p75
        %p612 = pneg %p99
        %p613 = pneg %p96
        %p614 = pneg %p120
        %p615 = pneg %p117
        %p616 = pneg %p141
        %p617 = pneg %p138
        %p618 = pneg %p162
        %p619 = pneg %p159
        %p620 = pneg %p183
        %p621 = pneg %p180
        %p622 = pneg %p204
        %p623 = pneg %p201
        %p624 = pneg %p225
        %p625 = pneg %p222
        %p626 = pneg %p246
        %p627 = pneg %p243
        %p628 = pneg %p267
        %p629 = pneg %p264
        %p630 = pneg %p288
        %p631 = pneg %p285
        %p632 = pneg %p309
        %p633 = pneg %p306
        %p634 = pneg %p330
        %p635 = pneg %p327
        %p636 = pneg %p351
        %p637 = pneg %p348
        %p638 = pneg %p372
        %p639 = pneg %p369
        %p640 = pneg %p393
        %p641 = pneg %p390
        %p642 = pneg %p414
        %p643 = pneg %p411
        %p644 = pneg %p440
        %p645 = pneg %p437
        %s646 = sand.u32 %s427, 1
        %s647 = scalar_lea.sflag [#allocation6], %s646
        %s648 = sand.u32 %s427, 1
        %s649 = scalar_lea.vmem [#allocation15], %s648
        %p650 = scmp.lt.s32.totalorder %s36, 1
        %s651 = scalar_select %p650, %s36, 1
        %s652 = smul.addr %s651, 8
        %s653 = scalar_lea.vmem %s0, %s652
        %v655 = vld [vmem:[%s653] sm:$0xff]
        %v656 = vpack.c.bf16 %v655, %v655
        %v657 = vld [vmem:[%s1] sm:$0xf]
        %v658 = vld [vmem:[%s1 + $0x4] sm:$0xf]
        %v659 = vld [vmem:[%s2] sm:$0x1]
        %v661 = vlaneseq
        %v662 = vshrl.u32 %v661, 7
        %v663 = vsub.s32 0, %v662
        %v664 = vrot.slane %v659, %v663
        %v668 = vunpack.c.l.b16 %v657
        %v669 = vunpack.c.l.b16 %v658
        %v670 = vpack.c.b16 %v669, %v668
        %vm672 = vcmask 130048
        %v674 = vsel %vm672, %v656, 0
        %676 = vmatprep.subr.bf16.mxu0 0
        %677 = vmatpush1.bf16.msra.mxu0 %v670
        %678 = vmatprep.subr.bf16.mxu0 0
        %679 = vmatpush1.bf16.msra.mxu0 0
        %680 = vmatprep.subr.bf16.mxu0 0
        %681 = vmatpush1.bf16.msra.mxu0 0
        %682 = vmatprep.subr.bf16.mxu0 0
        %683 = vmatpush1.bf16.msra.mxu0 0
        %684 = vmatprep.subr.bf16.mxu0 0
        %685 = vmatpush1.bf16.msra.mxu0 0
        %686 = vmatprep.subr.bf16.mxu0 0
        %687 = vmatpush1.bf16.msra.mxu0 0
        %688 = vmatprep.subr.bf16.mxu0 0
        %689 = vmatpush1.bf16.msra.mxu0 0
        %690 = vmatprep.subr.bf16.mxu0 0
        %691 = vmatpush1.bf16.msra.mxu0 0
        %692 = vmatprep.subr.bf16.mxu0 0
        %693 = vmatpush1.bf16.msra.mxu0 0
        %694 = vmatprep.subr.bf16.mxu0 0
        %695 = vmatpush1.bf16.msra.mxu0 0
        %696 = vmatprep.subr.bf16.mxu0 0
        %697 = vmatpush1.bf16.msra.mxu0 0
        %698 = vmatprep.subr.bf16.mxu0 0
        %699 = vmatpush1.bf16.msra.mxu0 0
        %700 = vmatprep.subr.bf16.mxu0 0
        %701 = vmatpush1.bf16.msra.mxu0 0
        %702 = vmatprep.subr.bf16.mxu0 0
        %703 = vmatpush1.bf16.msra.mxu0 0
        %704 = vmatprep.subr.bf16.mxu0 0
        %705 = vmatpush1.bf16.msra.mxu0 0
        %706 = vmatprep.subr.bf16.mxu0 0
        %707 = vmatpush1.bf16.msra.mxu0 0
        %708 = vmatprep.mubr.bf16.mxu0 0
        %709 = vmatmul.mubr.bf16.gmra.mrb[0].mxu0 %v674
        %v710 = vpop.f32.mrb[0].mxu0
        %v711 = vadd.f32 %v664, %v710
        %v712 = vpop.f32.mrb[0].mxu0
        %v713 = vpop.f32.mrb[0].mxu0
        %v714 = vpop.f32.mrb[0].mxu0
        %715 = vdwg.mxu0
        %v716 = vld [vmem:[#allocation4] sm:$0x1]
        %v717 = vld [vmem:[#allocation7] sm:$0xff]
        %vm718 = vcmask 253952
        %719 = vst.msk [vmem:[#allocation2] sm:$0x1] %vm718, %v716
        %v720 = vadd.f32 %v711, %v717
        %vm721 = vcmask 261120
        %722 = vst.msk [vmem:[#allocation2 + $0x1] sm:$0xff] %vm721, %v720
        %v723 = vld [vmem:[#allocation2] sm:$0xff]
        %v724 = vld [vmem:[#allocation2 + $0x8] sm:$0x1]
        %v725 = vpack.c.bf16 %v724, %v723
        %v726 = vld [vmem:[%s5] sm:$0xf]
        %v727 = vld [vmem:[%s5 + $0x4] sm:$0xf]
        %v728 = vld [vmem:[%s5 + $0x8] sm:$0xf]
        %v729 = vld [vmem:[%s5 + $0xc] sm:$0xf]
        %v734 = vunpack.c.l.b16 %v726
        %v735 = vunpack.c.l.b16 %v727
        %v736 = vunpack.c.l.b16 %v728
        %v737 = vunpack.c.l.b16 %v729
        %v738 = vpack.c.b16 %v735, %v734
        %v739 = vpack.c.b16 %v737, %v736
        %v743 = vsel %vm721, %v725, 0
        %745 = vmatprep.subr.bf16.mxu0 0
        %746 = vmatpush1.bf16.msra.mxu0 %v738
        %747 = vmatprep.subr.bf16.mxu0 0
        %748 = vmatpush1.bf16.msra.mxu0 %v739
        %749 = vmatprep.subr.bf16.mxu0 0
        %750 = vmatpush1.bf16.msra.mxu0 0
        %751 = vmatprep.subr.bf16.mxu0 0
        %752 = vmatpush1.bf16.msra.mxu0 0
        %753 = vmatprep.subr.bf16.mxu0 0
        %754 = vmatpush1.bf16.msra.mxu0 0
        %755 = vmatprep.subr.bf16.mxu0 0
        %756 = vmatpush1.bf16.msra.mxu0 0
        %757 = vmatprep.subr.bf16.mxu0 0
        %758 = vmatpush1.bf16.msra.mxu0 0
        %759 = vmatprep.subr.bf16.mxu0 0
        %760 = vmatpush1.bf16.msra.mxu0 0
        %761 = vmatprep.subr.bf16.mxu0 0
        %762 = vmatpush1.bf16.msra.mxu0 0
        %763 = vmatprep.subr.bf16.mxu0 0
        %764 = vmatpush1.bf16.msra.mxu0 0
        %765 = vmatprep.subr.bf16.mxu0 0
        %766 = vmatpush1.bf16.msra.mxu0 0
        %767 = vmatprep.subr.bf16.mxu0 0
        %768 = vmatpush1.bf16.msra.mxu0 0
        %769 = vmatprep.subr.bf16.mxu0 0
        %770 = vmatpush1.bf16.msra.mxu0 0
        %771 = vmatprep.subr.bf16.mxu0 0
        %772 = vmatpush1.bf16.msra.mxu0 0
        %773 = vmatprep.subr.bf16.mxu0 0
        %774 = vmatpush1.bf16.msra.mxu0 0
        %775 = vmatprep.subr.bf16.mxu0 0
        %776 = vmatpush1.bf16.msra.mxu0 0
        %777 = vmatprep.mubr.bf16.mxu0 0
        %778 = vmatmul.mubr.bf16.gmra.mrb[0].mxu0 %v743
        %v779 = vpop.f32.mrb[0].mxu0
        %v780 = vadd.f32 0.0, %v779
        %v781 = vpop.f32.mrb[0].mxu0
        %v782 = vpop.f32.mrb[0].mxu0
        %v783 = vadd.f32 0.0, %v782
        %v784 = vpop.f32.mrb[0].mxu0
        %785 = vdwg.mxu0
        %v786 = vpack.c.bf16 %v783, %v780
        %788 = vrot.lane.b32.xlu0 %v786, 96
        %v789 = vpop.permute.xlu0 %788
        %v791 = vsel %vm672, %v786, 0
        %v794 = vsel %vm672, %v789, 0
        %796 = vmatprep.subr.bf16.mxu0 0
        %797 = vmatpush1.bf16.xpose.msra.mxu0 %v794
        %798 = vmatprep.subr.bf16.mxu0 0
        %799 = vmatpush1.bf16.xpose.msra.mxu0 0
        %800 = vmatprep.subr.bf16.mxu0 0
        %801 = vmatpush1.bf16.xpose.msra.mxu0 0
        %802 = vmatprep.subr.bf16.mxu0 0
        %803 = vmatpush1.bf16.xpose.msra.mxu0 0
        %804 = vmatprep.subr.bf16.mxu0 0
        %805 = vmatpush1.bf16.xpose.msra.mxu0 0
        %806 = vmatprep.subr.bf16.mxu0 0
        %807 = vmatpush1.bf16.xpose.msra.mxu0 0
        %808 = vmatprep.subr.bf16.mxu0 0
        %809 = vmatpush1.bf16.xpose.msra.mxu0 0
        %810 = vmatprep.subr.bf16.mxu0 0
        %811 = vmatpush1.bf16.xpose.msra.mxu0 0
        %812 = vmatprep.subr.bf16.mxu0 0
        %813 = vmatpush1.bf16.xpose.msra.mxu0 0
        %814 = vmatprep.subr.bf16.mxu0 0
        %815 = vmatpush1.bf16.xpose.msra.mxu0 0
        %816 = vmatprep.subr.bf16.mxu0 0
        %817 = vmatpush1.bf16.xpose.msra.mxu0 0
        %818 = vmatprep.subr.bf16.mxu0 0
        %819 = vmatpush1.bf16.xpose.msra.mxu0 0
        %820 = vmatprep.subr.bf16.mxu0 0
        %821 = vmatpush1.bf16.xpose.msra.mxu0 0
        %822 = vmatprep.subr.bf16.mxu0 0
        %823 = vmatpush1.bf16.xpose.msra.mxu0 0
        %824 = vmatprep.subr.bf16.mxu0 0
        %825 = vmatpush1.bf16.xpose.msra.mxu0 0
        %826 = vmatprep.subr.bf16.mxu0 0
        %827 = vmatpush1.bf16.xpose.msra.mxu0 0
        %828 = vmatprep.mubr.bf16.mxu0 0
        %829 = vmatmul.mubr.bf16.gmra.mrb[0].mxu0 %v791
        %v830 = vpop.f32.mrb[0].mxu0
        %v831 = vadd.f32 0.0, %v830
        %v832 = vpop.f32.mrb[0].mxu0
        %v833 = vpop.f32.mrb[0].mxu0
        %v834 = vadd.f32 0.0, %v833
        %v835 = vpop.f32.mrb[0].mxu0
        %836 = vdwg.mxu0
        %vm837 = vcmask 72704
        %v838 = vsel %vm837, %v831, -inf
        %839 = vmax.xlane.f32.xlu0 %v838
        %v840 = vpop.xlane.xlu0 %839
        %vm841 = vcmask 65536
        %v842 = vsel %vm841, %v834, -inf
        %843 = vmax.xlane.f32.xlu0 %v842
        %v844 = vpop.xlane.xlu0 %843
        %v845 = vsub.f32 %v831, %v840
        %v846 = vsub.f32 %v834, %v844
        %v847 = vmul.f32 %v845, 1.442695
        %v848 = vpow.pop %v847
        %v849 = vmul.f32 %v846, 1.442695
        %v850 = vpow.pop %v849
        %v851 = vsel %vm837, %v848, 0.0
        %852 = vadd.xlane.f32.xlu0 %v851
        %v853 = vpop.xlane.xlu0 %852
        %v854 = vsel %vm841, %v850, 0.0
        %855 = vadd.xlane.f32.xlu0 %v854
        %v856 = vpop.xlane.xlu0 %855
        %v857 = vrcp.pop %v853
        %v858 = vrcp.pop %v856
        %v859 = vpack.c.bf16 %v850, %v848
        %860 = vrot.lane.b32.xlu0 %v786, 64
        %v861 = vpop.permute.xlu0 %860
        %v863 = vsel %vm837, %v859, 0
        %vm865 = vcmask 1043456
        %vm866 = vcmask 1044480
        %v867 = vsel %vm865, 4294967295, 65535
        %v868 = vsel %vm866, %v867, 0
        %v870 = vand.u32 %v861, %v868
        %872 = vmatprep.subr.bf16.mxu0 0
        %873 = vmatpush1.bf16.msra.mxu0 %v870
        %874 = vmatprep.subr.bf16.mxu0 0
        %875 = vmatpush1.bf16.msra.mxu0 0
        %876 = vmatprep.subr.bf16.mxu0 0
        %877 = vmatpush1.bf16.msra.mxu0 0
        %878 = vmatprep.subr.bf16.mxu0 0
        %879 = vmatpush1.bf16.msra.mxu0 0
        %880 = vmatprep.subr.bf16.mxu0 0
        %881 = vmatpush1.bf16.msra.mxu0 0
        %882 = vmatprep.subr.bf16.mxu0 0
        %883 = vmatpush1.bf16.msra.mxu0 0
        %884 = vmatprep.subr.bf16.mxu0 0
        %885 = vmatpush1.bf16.msra.mxu0 0
        %886 = vmatprep.subr.bf16.mxu0 0
        %887 = vmatpush1.bf16.msra.mxu0 0
        %888 = vmatprep.subr.bf16.mxu0 0
        %889 = vmatpush1.bf16.msra.mxu0 0
        %890 = vmatprep.subr.bf16.mxu0 0
        %891 = vmatpush1.bf16.msra.mxu0 0
        %892 = vmatprep.subr.bf16.mxu0 0
        %893 = vmatpush1.bf16.msra.mxu0 0
        %894 = vmatprep.subr.bf16.mxu0 0
        %895 = vmatpush1.bf16.msra.mxu0 0
        %896 = vmatprep.subr.bf16.mxu0 0
        %897 = vmatpush1.bf16.msra.mxu0 0
        %898 = vmatprep.subr.bf16.mxu0 0
        %899 = vmatpush1.bf16.msra.mxu0 0
        %900 = vmatprep.subr.bf16.mxu0 0
        %901 = vmatpush1.bf16.msra.mxu0 0
        %902 = vmatprep.subr.bf16.mxu0 0
        %903 = vmatpush1.bf16.msra.mxu0 0
        %904 = vmatprep.mubr.bf16.mxu0 0
        %905 = vmatmul.mubr.bf16.gmra.mrb[0].mxu0 %v863
        %v906 = vpop.f32.mrb[0].mxu0
        %v907 = vadd.f32 0.0, %v906
        %v908 = vpop.f32.mrb[0].mxu0
        %v909 = vpop.f32.mrb[0].mxu0
        %v910 = vadd.f32 0.0, %v909
        %v911 = vpop.f32.mrb[0].mxu0
        %912 = vdwg.mxu0
        %v913 = vmul.f32 %v907, %v857
        %v914 = vmul.f32 %v910, %v858
        %915 = vst.msk [vmem:[#allocation3] sm:$0xff] %vm672, %v913
        %vm916 = vcmask 122880
        %917 = vst.msk [vmem:[#allocation3 + $0x8] sm:$0x1] %vm916, %v914
        %918 = vrot.lane.b32.xlu0 %v786, 112
        %v919 = vpop.permute.xlu0 %918
        %920 = vrot.lane.b32.xlu0 %v786, 80
        %v921 = vpop.permute.xlu0 %920
        %v923 = vsel %vm672, %v919, 0
        %v926 = vsel %vm672, %v921, 0
        %928 = vmatprep.subr.bf16.mxu0 0
        %929 = vmatpush1.bf16.xpose.msra.mxu0 %v926
        %930 = vmatprep.subr.bf16.mxu0 0
        %931 = vmatpush1.bf16.xpose.msra.mxu0 0
        %932 = vmatprep.subr.bf16.mxu0 0
        %933 = vmatpush1.bf16.xpose.msra.mxu0 0
        %934 = vmatprep.subr.bf16.mxu0 0
        %935 = vmatpush1.bf16.xpose.msra.mxu0 0
        %936 = vmatprep.subr.bf16.mxu0 0
        %937 = vmatpush1.bf16.xpose.msra.mxu0 0
        %938 = vmatprep.subr.bf16.mxu0 0
        %939 = vmatpush1.bf16.xpose.msra.mxu0 0
        %940 = vmatprep.subr.bf16.mxu0 0
        %941 = vmatpush1.bf16.xpose.msra.mxu0 0
        %942 = vmatprep.subr.bf16.mxu0 0
        %943 = vmatpush1.bf16.xpose.msra.mxu0 0
        %944 = vmatprep.subr.bf16.mxu0 0
        %945 = vmatpush1.bf16.xpose.msra.mxu0 0
        %946 = vmatprep.subr.bf16.mxu0 0
        %947 = vmatpush1.bf16.xpose.msra.mxu0 0
        %948 = vmatprep.subr.bf16.mxu0 0
        %949 = vmatpush1.bf16.xpose.msra.mxu0 0
        %950 = vmatprep.subr.bf16.mxu0 0
        %951 = vmatpush1.bf16.xpose.msra.mxu0 0
        %952 = vmatprep.subr.bf16.mxu0 0
        %953 = vmatpush1.bf16.xpose.msra.mxu0 0
        %954 = vmatprep.subr.bf16.mxu0 0
        %955 = vmatpush1.bf16.xpose.msra.mxu0 0
        %956 = vmatprep.subr.bf16.mxu0 0
        %957 = vmatpush1.bf16.xpose.msra.mxu0 0
        %958 = vmatprep.subr.bf16.mxu0 0
        %959 = vmatpush1.bf16.xpose.msra.mxu0 0
        %960 = vmatprep.mubr.bf16.mxu0 0
        %961 = vmatmul.mubr.bf16.gmra.mrb[0].mxu0 %v923
        %v962 = vpop.f32.mrb[0].mxu0
        %v963 = vadd.f32 0.0, %v962
        %v964 = vpop.f32.mrb[0].mxu0
        %v965 = vpop.f32.mrb[0].mxu0
        %v966 = vadd.f32 0.0, %v965
        %v967 = vpop.f32.mrb[0].mxu0
        %968 = vdwg.mxu0
        %v969 = vsel %vm837, %v963, -inf
        %970 = vmax.xlane.f32.xlu0 %v969
        %v971 = vpop.xlane.xlu0 %970
        %v972 = vsel %vm841, %v966, -inf
        %973 = vmax.xlane.f32.xlu0 %v972
        %v974 = vpop.xlane.xlu0 %973
        %v975 = vsub.f32 %v963, %v971
        %v976 = vsub.f32 %v966, %v974
        %v977 = vmul.f32 %v975, 1.442695
        %v978 = vpow.pop %v977
        %v979 = vmul.f32 %v976, 1.442695
        %v980 = vpow.pop %v979
        %v981 = vsel %vm837, %v978, 0.0
        %982 = vadd.xlane.f32.xlu0 %v981
        %v983 = vpop.xlane.xlu0 %982
        %v984 = vsel %vm841, %v980, 0.0
        %985 = vadd.xlane.f32.xlu0 %v984
        %v986 = vpop.xlane.xlu0 %985
        %v987 = vrcp.pop %v983
        %v988 = vrcp.pop %v986
        %v989 = vpack.c.bf16 %v980, %v978
        %990 = vrot.lane.b32.xlu0 %v786, 48
        %v991 = vpop.permute.xlu0 %990
        %v993 = vsel %vm837, %v989, 0
        %v996 = vand.u32 %v991, %v868
        %998 = vmatprep.subr.bf16.mxu0 0
        %999 = vmatpush1.bf16.msra.mxu0 %v996
        %1000 = vmatprep.subr.bf16.mxu0 0
        %1001 = vmatpush1.bf16.msra.mxu0 0
        %1002 = vmatprep.subr.bf16.mxu0 0
        %1003 = vmatpush1.bf16.msra.mxu0 0
        %1004 = vmatprep.subr.bf16.mxu0 0
        %1005 = vmatpush1.bf16.msra.mxu0 0
        %1006 = vmatprep.subr.bf16.mxu0 0
        %1007 = vmatpush1.bf16.msra.mxu0 0
        %1008 = vmatprep.subr.bf16.mxu0 0
        %1009 = vmatpush1.bf16.msra.mxu0 0
        %1010 = vmatprep.subr.bf16.mxu0 0
        %1011 = vmatpush1.bf16.msra.mxu0 0
        %1012 = vmatprep.subr.bf16.mxu0 0
        %1013 = vmatpush1.bf16.msra.mxu0 0
        %1014 = vmatprep.subr.bf16.mxu0 0
        %1015 = vmatpush1.bf16.msra.mxu0 0
        %1016 = vmatprep.subr.bf16.mxu0 0
        %1017 = vmatpush1.bf16.msra.mxu0 0
        %1018 = vmatprep.subr.bf16.mxu0 0
        %1019 = vmatpush1.bf16.msra.mxu0 0
        %1020 = vmatprep.subr.bf16.mxu0 0
        %1021 = vmatpush1.bf16.msra.mxu0 0
        %1022 = vmatprep.subr.bf16.mxu0 0
        %1023 = vmatpush1.bf16.msra.mxu0 0
        %1024 = vmatprep.subr.bf16.mxu0 0
        %1025 = vmatpush1.bf16.msra.mxu0 0
        %1026 = vmatprep.subr.bf16.mxu0 0
        %1027 = vmatpush1.bf16.msra.mxu0 0
        %1028 = vmatprep.subr.bf16.mxu0 0
        %1029 = vmatpush1.bf16.msra.mxu0 0
        %1030 = vmatprep.mubr.bf16.mxu0 0
        %1031 = vmatmul.mubr.bf16.gmra.mrb[0].mxu0 %v993
        %v1032 = vpop.f32.mrb[0].mxu0
        %v1033 = vadd.f32 0.0, %v1032
        %v1034 = vpop.f32.mrb[0].mxu0
        %v1035 = vpop.f32.mrb[0].mxu0
        %v1036 = vadd.f32 0.0, %v1035
        %v1037 = vpop.f32.mrb[0].mxu0
        %1038 = vdwg.mxu0
        %v1039 = vmul.f32 %v1033, %v987
        %v1040 = vmul.f32 %v1036, %v988
        %1043 = vrot.lane.b32.xlu0 %v1039, 16
        %v1044 = vpop.permute.xlu0 %1043
        %1045 = vrot.lane.b32.xlu0 %v1040, 16
        %v1046 = vpop.permute.xlu0 %1045
        %vm1049 = vcmask 261248
        %1050 = vst.msk [vmem:[#allocation3] sm:$0xff] %vm1049, %v1044
        %vm1051 = vcmask 254080
        %1052 = vst.msk [vmem:[#allocation3 + $0x8] sm:$0x1] %vm1051, %v1046
        %v1053 = vld [vmem:[#allocation3] sm:$0xff]
        %v1054 = vld [vmem:[#allocation3 + $0x8] sm:$0x1]
        %v1055 = vpack.c.bf16 %v1054, %v1053
        %v1056 = vld [vmem:[%s6] sm:$0xf]
        %v1057 = vld [vmem:[%s6 + $0x4] sm:$0xf]
        %v1058 = vld [vmem:[%s6 + $0x8] sm:$0xf]
        %v1059 = vld [vmem:[%s6 + $0xc] sm:$0xf]
        %v1060 = vld [vmem:[#allocation9] sm:$0x1]
        %v1062 = vlaneseq
        %v1063 = vshrl.u32 %v1062, 7
        %v1064 = vsub.s32 0, %v1063
        %v1065 = vrot.slane %v1060, %v1064
        %v1071 = vunpack.c.l.b16 %v1056
        %v1072 = vunpack.c.l.b16 %v1057
        %v1073 = vunpack.c.l.b16 %v1058
        %v1074 = vunpack.c.l.b16 %v1059
        %v1075 = vpack.c.b16 %v1072, %v1071
        %v1076 = vpack.c.b16 %v1074, %v1073
        %v1080 = vsel %vm721, %v1055, 0
        %1082 = vmatprep.subr.bf16.mxu0 0
        %1083 = vmatpush1.bf16.msra.mxu0 %v1075
        %1084 = vmatprep.subr.bf16.mxu0 0
        %1085 = vmatpush1.bf16.msra.mxu0 %v1076
        %1086 = vmatprep.subr.bf16.mxu0 0
        %1087 = vmatpush1.bf16.msra.mxu0 0
        %1088 = vmatprep.subr.bf16.mxu0 0
        %1089 = vmatpush1.bf16.msra.mxu0 0
        %1090 = vmatprep.subr.bf16.mxu0 0
        %1091 = vmatpush1.bf16.msra.mxu0 0
        %1092 = vmatprep.subr.bf16.mxu0 0
        %1093 = vmatpush1.bf16.msra.mxu0 0
        %1094 = vmatprep.subr.bf16.mxu0 0
        %1095 = vmatpush1.bf16.msra.mxu0 0
        %1096 = vmatprep.subr.bf16.mxu0 0
        %1097 = vmatpush1.bf16.msra.mxu0 0
        %1098 = vmatprep.subr.bf16.mxu0 0
        %1099 = vmatpush1.bf16.msra.mxu0 0
        %1100 = vmatprep.subr.bf16.mxu0 0
        %1101 = vmatpush1.bf16.msra.mxu0 0
        %1102 = vmatprep.subr.bf16.mxu0 0
        %1103 = vmatpush1.bf16.msra.mxu0 0
        %1104 = vmatprep.subr.bf16.mxu0 0
        %1105 = vmatpush1.bf16.msra.mxu0 0
        %1106 = vmatprep.subr.bf16.mxu0 0
        %1107 = vmatpush1.bf16.msra.mxu0 0
        %1108 = vmatprep.subr.bf16.mxu0 0
        %1109 = vmatpush1.bf16.msra.mxu0 0
        %1110 = vmatprep.subr.bf16.mxu0 0
        %1111 = vmatpush1.bf16.msra.mxu0 0
        %1112 = vmatprep.subr.bf16.mxu0 0
        %1113 = vmatpush1.bf16.msra.mxu0 0
        %1114 = vmatprep.mubr.bf16.mxu0 0
        %1115 = vmatmul.mubr.bf16.gmra.mrb[0].mxu0 %v1080
        %v1116 = vpop.f32.mrb[0].mxu0
        %v1117 = vadd.f32 %v1065, %v1116
        %v1118 = vpop.f32.mrb[0].mxu0
        %v1119 = vpop.f32.mrb[0].mxu0
        %v1120 = vadd.f32 %v1065, %v1119
        %v1121 = vpop.f32.mrb[0].mxu0
        %1122 = vdwg.mxu0
        %v1123 = vadd.f32 %v1117, %v723
        %v1124 = vadd.f32 %v1120, %v724
        %v1125 = vld [vmem:[#allocation10] sm:$0x1]
        %v1126 = vld [vmem:[#allocation12] sm:$0x1]
        %v1127 = vsel %vm721, %v1123, 0.0
        %1128 = vadd.xlane.f32.xlu0 %v1127
        %v1129 = vpop.xlane.xlu0 %1128
        %v1130 = vsel %vm718, %v1124, 0.0
        %1131 = vadd.xlane.f32.xlu0 %v1130
        %v1132 = vpop.xlane.xlu0 %1131
        %v1133 = vrcp.pop 32.0
        %v1134 = vmul.f32 %v1129, %v1133
        %v1135 = vmul.f32 %v1132, %v1133
        %v1136 = vsub.f32 %v1123, %v1134
        %v1137 = vsub.f32 %v1124, %v1135
        %v1138 = vmul.f32 %v1136, %v1136
        %v1139 = vmul.f32 %v1137, %v1137
        %v1140 = vsel %vm721, %v1138, 0.0
        %1141 = vadd.xlane.f32.xlu0 %v1140
        %v1142 = vpop.xlane.xlu0 %1141
        %v1143 = vsel %vm718, %v1139, 0.0
        %1144 = vadd.xlane.f32.xlu0 %v1143
        %v1145 = vpop.xlane.xlu0 %1144
        %v1146 = vmul.f32 %v1142, %v1133
        %v1147 = vmul.f32 %v1145, %v1133
        %v1148 = vadd.f32 %v1146, 1e-05
        %v1149 = vadd.f32 %v1147, 1e-05
        %v1150 = vrsqrt.pop %v1148
        %v1151 = vrsqrt.pop %v1149
        %v1152 = vmul.f32 %v1136, %v1150
        %v1153 = vmul.f32 %v1137, %v1151
        %v1155 = vlaneseq
        %v1156 = vshrl.u32 %v1155, 7
        %v1157 = vsub.s32 0, %v1156
        %v1158 = vrot.slane %v1125, %v1157
        %v1160 = vmul.f32 %v1152, %v1158
        %v1161 = vmul.f32 %v1153, %v1158
        %v1163 = vlaneseq
        %v1164 = vshrl.u32 %v1163, 7
        %v1165 = vsub.s32 0, %v1164
        %v1166 = vrot.slane %v1126, %v1165
        %v1168 = vadd.f32 %v1160, %v1166
        %v1169 = vadd.f32 %v1161, %v1166
        %v1170 = vpack.c.bf16 %v1169, %v1168
        %v1171 = vld [vmem:[%s10] sm:$0xf]
        %v1172 = vld [vmem:[%s10 + $0x4] sm:$0xf]
        %v1173 = vld [vmem:[%s10 + $0x8] sm:$0xf]
        %v1174 = vld [vmem:[%s10 + $0xc] sm:$0xf]
        %v1175 = vld [vmem:[#allocation13] sm:$0x1]
        %v1177 = vlaneseq
        %v1178 = vshrl.u32 %v1177, 7
        %v1179 = vsub.s32 0, %v1178
        %v1180 = vrot.slane %v1175, %v1179
        %v1186 = vunpack.c.l.b16 %v1171
        %v1187 = vunpack.c.l.b16 %v1172
        %v1188 = vunpack.c.l.b16 %v1173
        %v1189 = vunpack.c.l.b16 %v1174
        %v1190 = vpack.c.b16 %v1187, %v1186
        %v1191 = vpack.c.b16 %v1189, %v1188
        %v1195 = vsel %vm721, %v1170, 0
        %1197 = vmatprep.subr.bf16.mxu0 0
        %1198 = vmatpush1.bf16.msra.mxu0 %v1190
        %1199 = vmatprep.subr.bf16.mxu0 0
        %1200 = vmatpush1.bf16.msra.mxu0 %v1191
        %1201 = vmatprep.subr.bf16.mxu0 0
        %1202 = vmatpush1.bf16.msra.mxu0 0
        %1203 = vmatprep.subr.bf16.mxu0 0
        %1204 = vmatpush1.bf16.msra.mxu0 0
        %1205 = vmatprep.subr.bf16.mxu0 0
        %1206 = vmatpush1.bf16.msra.mxu0 0
        %1207 = vmatprep.subr.bf16.mxu0 0
        %1208 = vmatpush1.bf16.msra.mxu0 0
        %1209 = vmatprep.subr.bf16.mxu0 0
        %1210 = vmatpush1.bf16.msra.mxu0 0
        %1211 = vmatprep.subr.bf16.mxu0 0
        %1212 = vmatpush1.bf16.msra.mxu0 0
        %1213 = vmatprep.subr.bf16.mxu0 0
        %1214 = vmatpush1.bf16.msra.mxu0 0
        %1215 = vmatprep.subr.bf16.mxu0 0
        %1216 = vmatpush1.bf16.msra.mxu0 0
        %1217 = vmatprep.subr.bf16.mxu0 0
        %1218 = vmatpush1.bf16.msra.mxu0 0
        %1219 = vmatprep.subr.bf16.mxu0 0
        %1220 = vmatpush1.bf16.msra.mxu0 0
        %1221 = vmatprep.subr.bf16.mxu0 0
        %1222 = vmatpush1.bf16.msra.mxu0 0
        %1223 = vmatprep.subr.bf16.mxu0 0
        %1224 = vmatpush1.bf16.msra.mxu0 0
        %1225 = vmatprep.subr.bf16.mxu0 0
        %1226 = vmatpush1.bf16.msra.mxu0 0
        %1227 = vmatprep.subr.bf16.mxu0 0
        %1228 = vmatpush1.bf16.msra.mxu0 0
        %1229 = vmatprep.mubr.bf16.mxu0 0
        %1230 = vmatmul.mubr.bf16.gmra.mrb[0].mxu0 %v1195
        %v1231 = vpop.f32.mrb[0].mxu0
        %v1232 = vadd.f32 %v1180, %v1231
        %v1233 = vpop.f32.mrb[0].mxu0
        %v1234 = vpop.f32.mrb[0].mxu0
        %v1235 = vadd.f32 %v1180, %v1234
        %v1236 = vpop.f32.mrb[0].mxu0
        %1237 = vdwg.mxu0
        %v1238 = vmul.f32 %v1232, 0.5
        %v1239 = vmul.f32 %v1235, 0.5
        %v1240 = vmul.f32 %v1232, 0.70710677
        %v1241 = vmul.f32 %v1235, 0.70710677
        %v1242 = verf.f32.pop %v1240
        %v1243 = verf.f32.pop %v1241
        %v1244 = vadd.f32 %v1242, 1.0
        %v1245 = vadd.f32 %v1243, 1.0
        %v1246 = vmul.f32 %v1238, %v1244
        %v1247 = vmul.f32 %v1239, %v1245
        %v1248 = vpack.c.bf16 %v1247, %v1246
        %v1249 = vld [vmem:[%s12] sm:$0xf]
        %v1250 = vld [vmem:[%s12 + $0x4] sm:$0xf]
        %v1251 = vld [vmem:[%s12 + $0x8] sm:$0xf]
        %v1252 = vld [vmem:[%s12 + $0xc] sm:$0xf]
        %v1253 = vld [vmem:[%s12 + $0x10] sm:$0xf]
        %v1254 = vld [vmem:[%s12 + $0x14] sm:$0xf]
        %v1255 = vld [vmem:[%s12 + $0x18] sm:$0xf]
        %v1256 = vld [vmem:[%s12 + $0x1c] sm:$0xf]
        %v1257 = vld [vmem:[%s13] sm:$0x1]
        %v1259 = vlaneseq
        %v1260 = vshrl.u32 %v1259, 7
        %v1261 = vsub.s32 0, %v1260
        %v1262 = vrot.slane %v1257, %v1261
        %v1272 = vunpack.c.l.b16 %v1249
        %v1273 = vunpack.c.l.b16 %v1250
        %v1274 = vunpack.c.l.b16 %v1251
        %v1275 = vunpack.c.l.b16 %v1252
        %v1276 = vunpack.c.l.b16 %v1253
        %v1277 = vunpack.c.l.b16 %v1254
        %v1278 = vunpack.c.l.b16 %v1255
        %v1279 = vunpack.c.l.b16 %v1256
        %v1280 = vpack.c.b16 %v1273, %v1272
        %v1281 = vpack.c.b16 %v1275, %v1274
        %v1282 = vpack.c.b16 %v1277, %v1276
        %v1283 = vpack.c.b16 %v1279, %v1278
        %vm1288 = vcmask 523264
        %v1290 = vsel %vm1288, %v1248, 0
        %1292 = vmatprep.subr.bf16.mxu0 0
        %1293 = vmatpush1.bf16.msra.mxu0 %v1280
        %1294 = vmatprep.subr.bf16.mxu0 0
        %1295 = vmatpush1.bf16.msra.mxu0 %v1281
        %1296 = vmatprep.subr.bf16.mxu0 0
        %1297 = vmatpush1.bf16.msra.mxu0 %v1282
        %1298 = vmatprep.subr.bf16.mxu0 0
        %1299 = vmatpush1.bf16.msra.mxu0 %v1283
        %1300 = vmatprep.subr.bf16.mxu0 0
        %1301 = vmatpush1.bf16.msra.mxu0 0
        %1302 = vmatprep.subr.bf16.mxu0 0
        %1303 = vmatpush1.bf16.msra.mxu0 0
        %1304 = vmatprep.subr.bf16.mxu0 0
        %1305 = vmatpush1.bf16.msra.mxu0 0
        %1306 = vmatprep.subr.bf16.mxu0 0
        %1307 = vmatpush1.bf16.msra.mxu0 0
        %1308 = vmatprep.subr.bf16.mxu0 0
        %1309 = vmatpush1.bf16.msra.mxu0 0
        %1310 = vmatprep.subr.bf16.mxu0 0
        %1311 = vmatpush1.bf16.msra.mxu0 0
        %1312 = vmatprep.subr.bf16.mxu0 0
        %1313 = vmatpush1.bf16.msra.mxu0 0
        %1314 = vmatprep.subr.bf16.mxu0 0
        %1315 = vmatpush1.bf16.msra.mxu0 0
        %1316 = vmatprep.subr.bf16.mxu0 0
        %1317 = vmatpush1.bf16.msra.mxu0 0
        %1318 = vmatprep.subr.bf16.mxu0 0
        %1319 = vmatpush1.bf16.msra.mxu0 0
        %1320 = vmatprep.subr.bf16.mxu0 0
        %1321 = vmatpush1.bf16.msra.mxu0 0
        %1322 = vmatprep.subr.bf16.mxu0 0
        %1323 = vmatpush1.bf16.msra.mxu0 0
        %1324 = vmatprep.mubr.bf16.mxu0 0
        %1325 = vmatmul.mubr.bf16.gmra.mrb[0].mxu0 %v1290
        %v1326 = vpop.f32.mrb[0].mxu0
        %v1327 = vadd.f32 %v1262, %v1326
        %v1328 = vpop.f32.mrb[0].mxu0
        %v1329 = vpop.f32.mrb[0].mxu0
        %v1330 = vadd.f32 %v1262, %v1329
        %v1331 = vpop.f32.mrb[0].mxu0
        %1332 = vdwg.mxu0
        %v1333 = vadd.f32 %v1327, %v1168
        %v1334 = vadd.f32 %v1330, %v1169
        %v1335 = vld [vmem:[%s14] sm:$0x1]
        %v1336 = vld [vmem:[%s15] sm:$0x1]
        %v1337 = vsel %vm721, %v1333, 0.0
        %1338 = vadd.xlane.f32.xlu0 %v1337
        %v1339 = vpop.xlane.xlu0 %1338
        %v1340 = vsel %vm718, %v1334, 0.0
        %1341 = vadd.xlane.f32.xlu0 %v1340
        %v1342 = vpop.xlane.xlu0 %1341
        %v1343 = vmul.f32 %v1339, %v1133
        %v1344 = vmul.f32 %v1342, %v1133
        %v1345 = vsub.f32 %v1333, %v1343
        %v1346 = vsub.f32 %v1334, %v1344
        %v1347 = vmul.f32 %v1345, %v1345
        %v1348 = vmul.f32 %v1346, %v1346
        %v1349 = vsel %vm721, %v1347, 0.0
        %1350 = vadd.xlane.f32.xlu0 %v1349
        %v1351 = vpop.xlane.xlu0 %1350
        %v1352 = vsel %vm718, %v1348, 0.0
        %1353 = vadd.xlane.f32.xlu0 %v1352
        %v1354 = vpop.xlane.xlu0 %1353
        %v1355 = vmul.f32 %v1351, %v1133
        %v1356 = vmul.f32 %v1354, %v1133
        %v1357 = vadd.f32 %v1355, 1e-05
        %v1358 = vadd.f32 %v1356, 1e-05
        %v1359 = vrsqrt.pop %v1357
        %v1360 = vrsqrt.pop %v1358
        %v1361 = vmul.f32 %v1345, %v1359
        %v1362 = vmul.f32 %v1346, %v1360
        %v1364 = vlaneseq
        %v1365 = vshrl.u32 %v1364, 7
        %v1366 = vsub.s32 0, %v1365
        %v1367 = vrot.slane %v1335, %v1366
        %v1369 = vmul.f32 %v1361, %v1367
        %v1370 = vmul.f32 %v1362, %v1367
        %v1372 = vlaneseq
        %v1373 = vshrl.u32 %v1372, 7
        %v1374 = vsub.s32 0, %v1373
        %v1375 = vrot.slane %v1336, %v1374
        %v1377 = vadd.f32 %v1369, %v1375
        %v1378 = vadd.f32 %v1370, %v1375
        %v1379 = vpack.c.bf16 %v1378, %v1377
        %s1380 = scalar_lea.vmem %s5, 16
        %v1381 = vld [vmem:[%s1380] sm:$0xf]
        %v1382 = vld [vmem:[%s1380 + $0x4] sm:$0xf]
        %v1383 = vld [vmem:[%s1380 + $0x8] sm:$0xf]
        %v1384 = vld [vmem:[%s1380 + $0xc] sm:$0xf]
        %v1389 = vunpack.c.l.b16 %v1381
        %v1390 = vunpack.c.l.b16 %v1382
        %v1391 = vunpack.c.l.b16 %v1383
        %v1392 = vunpack.c.l.b16 %v1384
        %v1393 = vpack.c.b16 %v1390, %v1389
        %v1394 = vpack.c.b16 %v1392, %v1391
        %v1398 = vsel %vm721, %v1379, 0
        %1400 = vmatprep.subr.bf16.mxu0 0
        %1401 = vmatpush1.bf16.msra.mxu0 %v1393
        %1402 = vmatprep.subr.bf16.mxu0 0
        %1403 = vmatpush1.bf16.msra.mxu0 %v1394
        %1404 = vmatprep.subr.bf16.mxu0 0
        %1405 = vmatpush1.bf16.msra.mxu0 0
        %1406 = vmatprep.subr.bf16.mxu0 0
        %1407 = vmatpush1.bf16.msra.mxu0 0
        %1408 = vmatprep.subr.bf16.mxu0 0
        %1409 = vmatpush1.bf16.msra.mxu0 0
        %1410 = vmatprep.subr.bf16.mxu0 0
        %1411 = vmatpush1.bf16.msra.mxu0 0
        %1412 = vmatprep.subr.bf16.mxu0 0
        %1413 = vmatpush1.bf16.msra.mxu0 0
        %1414 = vmatprep.subr.bf16.mxu0 0
        %1415 = vmatpush1.bf16.msra.mxu0 0
        %1416 = vmatprep.subr.bf16.mxu0 0
        %1417 = vmatpush1.bf16.msra.mxu0 0
        %1418 = vmatprep.subr.bf16.mxu0 0
        %1419 = vmatpush1.bf16.msra.mxu0 0
        %1420 = vmatprep.subr.bf16.mxu0 0
        %1421 = vmatpush1.bf16.msra.mxu0 0
        %1422 = vmatprep.subr.bf16.mxu0 0
        %1423 = vmatpush1.bf16.msra.mxu0 0
        %1424 = vmatprep.subr.bf16.mxu0 0
        %1425 = vmatpush1.bf16.msra.mxu0 0
        %1426 = vmatprep.subr.bf16.mxu0 0
        %1427 = vmatpush1.bf16.msra.mxu0 0
        %1428 = vmatprep.subr.bf16.mxu0 0
        %1429 = vmatpush1.bf16.msra.mxu0 0
        %1430 = vmatprep.subr.bf16.mxu0 0
        %1431 = vmatpush1.bf16.msra.mxu0 0
        %1432 = vmatprep.mubr.bf16.mxu0 0
        %1433 = vmatmul.mubr.bf16.gmra.mrb[0].mxu0 %v1398
        %v1434 = vpop.f32.mrb[0].mxu0
        %v1435 = vadd.f32 0.0, %v1434
        %v1436 = vpop.f32.mrb[0].mxu0
        %v1437 = vpop.f32.mrb[0].mxu0
        %v1438 = vadd.f32 0.0, %v1437
        %v1439 = vpop.f32.mrb[0].mxu0
        %1440 = vdwg.mxu0
        %v1441 = vpack.c.bf16 %v1438, %v1435
        %1443 = vrot.lane.b32.xlu0 %v1441, 96
        %v1444 = vpop.permute.xlu0 %1443
        %v1446 = vsel %vm672, %v1441, 0
        %v1449 = vsel %vm672, %v1444, 0
        %1451 = vmatprep.subr.bf16.mxu0 0
        %1452 = vmatpush1.bf16.xpose.msra.mxu0 %v1449
        %1453 = vmatprep.subr.bf16.mxu0 0
        %1454 = vmatpush1.bf16.xpose.msra.mxu0 0
        %1455 = vmatprep.subr.bf16.mxu0 0
        %1456 = vmatpush1.bf16.xpose.msra.mxu0 0
        %1457 = vmatprep.subr.bf16.mxu0 0
        %1458 = vmatpush1.bf16.xpose.msra.mxu0 0
        %1459 = vmatprep.subr.bf16.mxu0 0
        %1460 = vmatpush1.bf16.xpose.msra.mxu0 0
        %1461 = vmatprep.subr.bf16.mxu0 0
        %1462 = vmatpush1.bf16.xpose.msra.mxu0 0
        %1463 = vmatprep.subr.bf16.mxu0 0
        %1464 = vmatpush1.bf16.xpose.msra.mxu0 0
        %1465 = vmatprep.subr.bf16.mxu0 0
        %1466 = vmatpush1.bf16.xpose.msra.mxu0 0
        %1467 = vmatprep.subr.bf16.mxu0 0
        %1468 = vmatpush1.bf16.xpose.msra.mxu0 0
        %1469 = vmatprep.subr.bf16.mxu0 0
        %1470 = vmatpush1.bf16.xpose.msra.mxu0 0
        %1471 = vmatprep.subr.bf16.mxu0 0
        %1472 = vmatpush1.bf16.xpose.msra.mxu0 0
        %1473 = vmatprep.subr.bf16.mxu0 0
        %1474 = vmatpush1.bf16.xpose.msra.mxu0 0
        %1475 = vmatprep.subr.bf16.mxu0 0
        %1476 = vmatpush1.bf16.xpose.msra.mxu0 0
        %1477 = vmatprep.subr.bf16.mxu0 0
        %1478 = vmatpush1.bf16.xpose.msra.mxu0 0
        %1479 = vmatprep.subr.bf16.mxu0 0
        %1480 = vmatpush1.bf16.xpose.msra.mxu0 0
        %1481 = vmatprep.subr.bf16.mxu0 0
        %1482 = vmatpush1.bf16.xpose.msra.mxu0 0
        %1483 = vmatprep.mubr.bf16.mxu0 0
        %1484 = vmatmul.mubr.bf16.gmra.mrb[0].mxu0 %v1446
        %v1485 = vpop.f32.mrb[0].mxu0
        %v1486 = vadd.f32 0.0, %v1485
        %v1487 = vpop.f32.mrb[0].mxu0
        %v1488 = vpop.f32.mrb[0].mxu0
        %v1489 = vadd.f32 0.0, %v1488
        %v1490 = vpop.f32.mrb[0].mxu0
        %1491 = vdwg.mxu0
        %v1492 = vsel %vm837, %v1486, -inf
        %1493 = vmax.xlane.f32.xlu0 %v1492
        %v1494 = vpop.xlane.xlu0 %1493
        %v1495 = vsel %vm841, %v1489, -inf
        %1496 = vmax.xlane.f32.xlu0 %v1495
        %v1497 = vpop.xlane.xlu0 %1496
        %v1498 = vsub.f32 %v1486, %v1494
        %v1499 = vsub.f32 %v1489, %v1497
        %v1500 = vmul.f32 %v1498, 1.442695
        %v1501 = vpow.pop %v1500
        %v1502 = vmul.f32 %v1499, 1.442695
        %v1503 = vpow.pop %v1502
        %v1504 = vsel %vm837, %v1501, 0.0
        %1505 = vadd.xlane.f32.xlu0 %v1504
        %v1506 = vpop.xlane.xlu0 %1505
        %v1507 = vsel %vm841, %v1503, 0.0
        %1508 = vadd.xlane.f32.xlu0 %v1507
        %v1509 = vpop.xlane.xlu0 %1508
        %v1510 = vrcp.pop %v1506
        %v1511 = vrcp.pop %v1509
        %v1512 = vpack.c.bf16 %v1503, %v1501
        %1513 = vrot.lane.b32.xlu0 %v1441, 64
        %v1514 = vpop.permute.xlu0 %1513
        %v1516 = vsel %vm837, %v1512, 0
        %v1519 = vand.u32 %v1514, %v868
        %1521 = vmatprep.subr.bf16.mxu0 0
        %1522 = vmatpush1.bf16.msra.mxu0 %v1519
        %1523 = vmatprep.subr.bf16.mxu0 0
        %1524 = vmatpush1.bf16.msra.mxu0 0
        %1525 = vmatprep.subr.bf16.mxu0 0
        %1526 = vmatpush1.bf16.msra.mxu0 0
        %1527 = vmatprep.subr.bf16.mxu0 0
        %1528 = vmatpush1.bf16.msra.mxu0 0
        %1529 = vmatprep.subr.bf16.mxu0 0
        %1530 = vmatpush1.bf16.msra.mxu0 0
        %1531 = vmatprep.subr.bf16.mxu0 0
        %1532 = vmatpush1.bf16.msra.mxu0 0
        %1533 = vmatprep.subr.bf16.mxu0 0
        %1534 = vmatpush1.bf16.msra.mxu0 0
        %1535 = vmatprep.subr.bf16.mxu0 0
        %1536 = vmatpush1.bf16.msra.mxu0 0
        %1537 = vmatprep.subr.bf16.mxu0 0
        %1538 = vmatpush1.bf16.msra.mxu0 0
        %1539 = vmatprep.subr.bf16.mxu0 0
        %1540 = vmatpush1.bf16.msra.mxu0 0
        %1541 = vmatprep.subr.bf16.mxu0 0
        %1542 = vmatpush1.bf16.msra.mxu0 0
        %1543 = vmatprep.subr.bf16.mxu0 0
        %1544 = vmatpush1.bf16.msra.mxu0 0
        %1545 = vmatprep.subr.bf16.mxu0 0
        %1546 = vmatpush1.bf16.msra.mxu0 0
        %1547 = vmatprep.subr.bf16.mxu0 0
        %1548 = vmatpush1.bf16.msra.mxu0 0
        %1549 = vmatprep.subr.bf16.mxu0 0
        %1550 = vmatpush1.bf16.msra.mxu0 0
        %1551 = vmatprep.subr.bf16.mxu0 0
        %1552 = vmatpush1.bf16.msra.mxu0 0
        %1553 = vmatprep.mubr.bf16.mxu0 0
        %1554 = vmatmul.mubr.bf16.gmra.mrb[0].mxu0 %v1516
        %v1555 = vpop.f32.mrb[0].mxu0
        %v1556 = vadd.f32 0.0, %v1555
        %v1557 = vpop.f32.mrb[0].mxu0
        %v1558 = vpop.f32.mrb[0].mxu0
        %v1559 = vadd.f32 0.0, %v1558
        %v1560 = vpop.f32.mrb[0].mxu0
        %1561 = vdwg.mxu0
        %v1562 = vmul.f32 %v1556, %v1510
        %v1563 = vmul.f32 %v1559, %v1511
        %1564 = vst.msk [vmem:[#allocation3] sm:$0xff] %vm672, %v1562
        %1565 = vst.msk [vmem:[#allocation3 + $0x8] sm:$0x1] %vm916, %v1563
        %1566 = vrot.lane.b32.xlu0 %v1441, 112
        %v1567 = vpop.permute.xlu0 %1566
        %1568 = vrot.lane.b32.xlu0 %v1441, 80
        %v1569 = vpop.permute.xlu0 %1568
        %v1571 = vsel %vm672, %v1567, 0
        %v1574 = vsel %vm672, %v1569, 0
        %1576 = vmatprep.subr.bf16.mxu0 0
        %1577 = vmatpush1.bf16.xpose.msra.mxu0 %v1574
        %1578 = vmatprep.subr.bf16.mxu0 0
        %1579 = vmatpush1.bf16.xpose.msra.mxu0 0
        %1580 = vmatprep.subr.bf16.mxu0 0
        %1581 = vmatpush1.bf16.xpose.msra.mxu0 0
        %1582 = vmatprep.subr.bf16.mxu0 0
        %1583 = vmatpush1.bf16.xpose.msra.mxu0 0
        %1584 = vmatprep.subr.bf16.mxu0 0
        %1585 = vmatpush1.bf16.xpose.msra.mxu0 0
        %1586 = vmatprep.subr.bf16.mxu0 0
        %1587 = vmatpush1.bf16.xpose.msra.mxu0 0
        %1588 = vmatprep.subr.bf16.mxu0 0
        %1589 = vmatpush1.bf16.xpose.msra.mxu0 0
        %1590 = vmatprep.subr.bf16.mxu0 0
        %1591 = vmatpush1.bf16.xpose.msra.mxu0 0
        %1592 = vmatprep.subr.bf16.mxu0 0
        %1593 = vmatpush1.bf16.xpose.msra.mxu0 0
        %1594 = vmatprep.subr.bf16.mxu0 0
        %1595 = vmatpush1.bf16.xpose.msra.mxu0 0
        %1596 = vmatprep.subr.bf16.mxu0 0
        %1597 = vmatpush1.bf16.xpose.msra.mxu0 0
        %1598 = vmatprep.subr.bf16.mxu0 0
        %1599 = vmatpush1.bf16.xpose.msra.mxu0 0
        %1600 = vmatprep.subr.bf16.mxu0 0
        %1601 = vmatpush1.bf16.xpose.msra.mxu0 0
        %1602 = vmatprep.subr.bf16.mxu0 0
        %1603 = vmatpush1.bf16.xpose.msra.mxu0 0
        %1604 = vmatprep.subr.bf16.mxu0 0
        %1605 = vmatpush1.bf16.xpose.msra.mxu0 0
        %1606 = vmatprep.subr.bf16.mxu0 0
        %1607 = vmatpush1.bf16.xpose.msra.mxu0 0
        %1608 = vmatprep.mubr.bf16.mxu0 0
        %1609 = vmatmul.mubr.bf16.gmra.mrb[0].mxu0 %v1571
        %v1610 = vpop.f32.mrb[0].mxu0
        %v1611 = vadd.f32 0.0, %v1610
        %v1612 = vpop.f32.mrb[0].mxu0
        %v1613 = vpop.f32.mrb[0].mxu0
        %v1614 = vadd.f32 0.0, %v1613
        %v1615 = vpop.f32.mrb[0].mxu0
        %1616 = vdwg.mxu0
        %v1617 = vsel %vm837, %v1611, -inf
        %1618 = vmax.xlane.f32.xlu0 %v1617
        %v1619 = vpop.xlane.xlu0 %1618
        %v1620 = vsel %vm841, %v1614, -inf
        %1621 = vmax.xlane.f32.xlu0 %v1620
        %v1622 = vpop.xlane.xlu0 %1621
        %v1623 = vsub.f32 %v1611, %v1619
        %v1624 = vsub.f32 %v1614, %v1622
        %v1625 = vmul.f32 %v1623, 1.442695
        %v1626 = vpow.pop %v1625
        %v1627 = vmul.f32 %v1624, 1.442695
        %v1628 = vpow.pop %v1627
        %v1629 = vsel %vm837, %v1626, 0.0
        %1630 = vadd.xlane.f32.xlu0 %v1629
        %v1631 = vpop.xlane.xlu0 %1630
        %v1632 = vsel %vm841, %v1628, 0.0
        %1633 = vadd.xlane.f32.xlu0 %v1632
        %v1634 = vpop.xlane.xlu0 %1633
        %v1635 = vrcp.pop %v1631
        %v1636 = vrcp.pop %v1634
        %v1637 = vpack.c.bf16 %v1628, %v1626
        %1638 = vrot.lane.b32.xlu0 %v1441, 48
        %v1639 = vpop.permute.xlu0 %1638
        %v1641 = vsel %vm837, %v1637, 0
        %v1644 = vand.u32 %v1639, %v868
        %1646 = vmatprep.subr.bf16.mxu0 0
        %1647 = vmatpush1.bf16.msra.mxu0 %v1644
        %1648 = vmatprep.subr.bf16.mxu0 0
        %1649 = vmatpush1.bf16.msra.mxu0 0
        %1650 = vmatprep.subr.bf16.mxu0 0
        %1651 = vmatpush1.bf16.msra.mxu0 0
        %1652 = vmatprep.subr.bf16.mxu0 0
        %1653 = vmatpush1.bf16.msra.mxu0 0
        %1654 = vmatprep.subr.bf16.mxu0 0
        %1655 = vmatpush1.bf16.msra.mxu0 0
        %1656 = vmatprep.subr.bf16.mxu0 0
        %1657 = vmatpush1.bf16.msra.mxu0 0
        %1658 = vmatprep.subr.bf16.mxu0 0
        %1659 = vmatpush1.bf16.msra.mxu0 0
        %1660 = vmatprep.subr.bf16.mxu0 0
        %1661 = vmatpush1.bf16.msra.mxu0 0
        %1662 = vmatprep.subr.bf16.mxu0 0
        %1663 = vmatpush1.bf16.msra.mxu0 0
        %1664 = vmatprep.subr.bf16.mxu0 0
        %1665 = vmatpush1.bf16.msra.mxu0 0
        %1666 = vmatprep.subr.bf16.mxu0 0
        %1667 = vmatpush1.bf16.msra.mxu0 0
        %1668 = vmatprep.subr.bf16.mxu0 0
        %1669 = vmatpush1.bf16.msra.mxu0 0
        %1670 = vmatprep.subr.bf16.mxu0 0
        %1671 = vmatpush1.bf16.msra.mxu0 0
        %1672 = vmatprep.subr.bf16.mxu0 0
        %1673 = vmatpush1.bf16.msra.mxu0 0
        %1674 = vmatprep.subr.bf16.mxu0 0
        %1675 = vmatpush1.bf16.msra.mxu0 0
        %1676 = vmatprep.subr.bf16.mxu0 0
        %1677 = vmatpush1.bf16.msra.mxu0 0
        %1678 = vmatprep.mubr.bf16.mxu0 0
        %1679 = vmatmul.mubr.bf16.gmra.mrb[0].mxu0 %v1641
        %v1680 = vpop.f32.mrb[0].mxu0
        %v1681 = vadd.f32 0.0, %v1680
        %v1682 = vpop.f32.mrb[0].mxu0
        %v1683 = vpop.f32.mrb[0].mxu0
        %v1684 = vadd.f32 0.0, %v1683
        %v1685 = vpop.f32.mrb[0].mxu0
        %1686 = vdwg.mxu0
        %v1687 = vmul.f32 %v1681, %v1635
        %v1688 = vmul.f32 %v1684, %v1636
        %1691 = vrot.lane.b32.xlu0 %v1687, 16
        %v1692 = vpop.permute.xlu0 %1691
        %1693 = vrot.lane.b32.xlu0 %v1688, 16
        %v1694 = vpop.permute.xlu0 %1693
        %1697 = vst.msk [vmem:[#allocation3] sm:$0xff] %vm1049, %v1692
        %1698 = vst.msk [vmem:[#allocation3 + $0x8] sm:$0x1] %vm1051, %v1694
        %v1699 = vld [vmem:[#allocation3] sm:$0xff]
        %v1700 = vld [vmem:[#allocation3 + $0x8] sm:$0x1]
        %v1701 = vpack.c.bf16 %v1700, %v1699
        %s1702 = scalar_lea.vmem %s6, 16
        %v1703 = vld [vmem:[%s1702] sm:$0xf]
        %v1704 = vld [vmem:[%s1702 + $0x4] sm:$0xf]
        %v1705 = vld [vmem:[%s1702 + $0x8] sm:$0xf]
        %v1706 = vld [vmem:[%s1702 + $0xc] sm:$0xf]
        %s1707 = scalar_lea.vmem [#allocation9], 1
        %v1708 = vld [vmem:[%s1707] sm:$0x1]
        %v1710 = vlaneseq
        %v1711 = vshrl.u32 %v1710, 7
        %v1712 = vsub.s32 0, %v1711
        %v1713 = vrot.slane %v1708, %v1712
        %v1719 = vunpack.c.l.b16 %v1703
        %v1720 = vunpack.c.l.b16 %v1704
        %v1721 = vunpack.c.l.b16 %v1705
        %v1722 = vunpack.c.l.b16 %v1706
        %v1723 = vpack.c.b16 %v1720, %v1719
        %v1724 = vpack.c.b16 %v1722, %v1721
        %v1728 = vsel %vm721, %v1701, 0
        %1730 = vmatprep.subr.bf16.mxu0 0
        %1731 = vmatpush1.bf16.msra.mxu0 %v1723
        %1732 = vmatprep.subr.bf16.mxu0 0
        %1733 = vmatpush1.bf16.msra.mxu0 %v1724
        %1734 = vmatprep.subr.bf16.mxu0 0
        %1735 = vmatpush1.bf16.msra.mxu0 0
        %1736 = vmatprep.subr.bf16.mxu0 0
        %1737 = vmatpush1.bf16.msra.mxu0 0
        %1738 = vmatprep.subr.bf16.mxu0 0
        %1739 = vmatpush1.bf16.msra.mxu0 0
        %1740 = vmatprep.subr.bf16.mxu0 0
        %1741 = vmatpush1.bf16.msra.mxu0 0
        %1742 = vmatprep.subr.bf16.mxu0 0
        %1743 = vmatpush1.bf16.msra.mxu0 0
        %1744 = vmatprep.subr.bf16.mxu0 0
        %1745 = vmatpush1.bf16.msra.mxu0 0
        %1746 = vmatprep.subr.bf16.mxu0 0
        %1747 = vmatpush1.bf16.msra.mxu0 0
        %1748 = vmatprep.subr.bf16.mxu0 0
        %1749 = vmatpush1.bf16.msra.mxu0 0
        %1750 = vmatprep.subr.bf16.mxu0 0
        %1751 = vmatpush1.bf16.msra.mxu0 0
        %1752 = vmatprep.subr.bf16.mxu0 0
        %1753 = vmatpush1.bf16.msra.mxu0 0
        %1754 = vmatprep.subr.bf16.mxu0 0
        %1755 = vmatpush1.bf16.msra.mxu0 0
        %1756 = vmatprep.subr.bf16.mxu0 0
        %1757 = vmatpush1.bf16.msra.mxu0 0
        %1758 = vmatprep.subr.bf16.mxu0 0
        %1759 = vmatpush1.bf16.msra.mxu0 0
        %1760 = vmatprep.subr.bf16.mxu0 0
        %1761 = vmatpush1.bf16.msra.mxu0 0
        %1762 = vmatprep.mubr.bf16.mxu0 0
        %1763 = vmatmul.mubr.bf16.gmra.mrb[0].mxu0 %v1728
        %v1764 = vpop.f32.mrb[0].mxu0
        %v1765 = vadd.f32 %v1713, %v1764
        %v1766 = vpop.f32.mrb[0].mxu0
        %v1767 = vpop.f32.mrb[0].mxu0
        %v1768 = vadd.f32 %v1713, %v1767
        %v1769 = vpop.f32.mrb[0].mxu0
        %1770 = vdwg.mxu0
        %v1771 = vadd.f32 %v1765, %v1377
        %v1772 = vadd.f32 %v1768, %v1378
        %s1773 = scalar_lea.vmem [#allocation10], 1
        %v1774 = vld [vmem:[%s1773] sm:$0x1]
        %s1775 = scalar_lea.vmem [#allocation12], 1
        %v1776 = vld [vmem:[%s1775] sm:$0x1]
        %v1777 = vsel %vm721, %v1771, 0.0
        %1778 = vadd.xlane.f32.xlu0 %v1777
        %v1779 = vpop.xlane.xlu0 %1778
        %v1780 = vsel %vm718, %v1772, 0.0
        %1781 = vadd.xlane.f32.xlu0 %v1780
        %v1782 = vpop.xlane.xlu0 %1781
        %v1783 = vmul.f32 %v1779, %v1133
        %v1784 = vmul.f32 %v1782, %v1133
        %v1785 = vsub.f32 %v1771, %v1783
        %v1786 = vsub.f32 %v1772, %v1784
        %v1787 = vmul.f32 %v1785, %v1785
        %v1788 = vmul.f32 %v1786, %v1786
        %v1789 = vsel %vm721, %v1787, 0.0
        %1790 = vadd.xlane.f32.xlu0 %v1789
        %v1791 = vpop.xlane.xlu0 %1790
        %v1792 = vsel %vm718, %v1788, 0.0
        %1793 = vadd.xlane.f32.xlu0 %v1792
        %v1794 = vpop.xlane.xlu0 %1793
        %v1795 = vmul.f32 %v1791, %v1133
        %v1796 = vmul.f32 %v1794, %v1133
        %v1797 = vadd.f32 %v1795, 1e-05
        %v1798 = vadd.f32 %v1796, 1e-05
        %v1799 = vrsqrt.pop %v1797
        %v1800 = vrsqrt.pop %v1798
        %v1801 = vmul.f32 %v1785, %v1799
        %v1802 = vmul.f32 %v1786, %v1800
        %v1804 = vlaneseq
        %v1805 = vshrl.u32 %v1804, 7
        %v1806 = vsub.s32 0, %v1805
        %v1807 = vrot.slane %v1774, %v1806
        %v1809 = vmul.f32 %v1801, %v1807
        %v1810 = vmul.f32 %v1802, %v1807
        %v1812 = vlaneseq
        %v1813 = vshrl.u32 %v1812, 7
        %v1814 = vsub.s32 0, %v1813
        %v1815 = vrot.slane %v1776, %v1814
        %v1817 = vadd.f32 %v1809, %v1815
        %v1818 = vadd.f32 %v1810, %v1815
        %v1819 = vpack.c.bf16 %v1818, %v1817
        %s1820 = scalar_lea.vmem %s10, 16
        %v1821 = vld [vmem:[%s1820] sm:$0xf]
        %v1822 = vld [vmem:[%s1820 + $0x4] sm:$0xf]
        %v1823 = vld [vmem:[%s1820 + $0x8] sm:$0xf]
        %v1824 = vld [vmem:[%s1820 + $0xc] sm:$0xf]
        %s1825 = scalar_lea.vmem [#allocation13], 1
        %v1826 = vld [vmem:[%s1825] sm:$0x1]
        %v1828 = vlaneseq
        %v1829 = vshrl.u32 %v1828, 7
        %v1830 = vsub.s32 0, %v1829
        %v1831 = vrot.slane %v1826, %v1830
        %v1837 = vunpack.c.l.b16 %v1821
        %v1838 = vunpack.c.l.b16 %v1822
        %v1839 = vunpack.c.l.b16 %v1823
        %v1840 = vunpack.c.l.b16 %v1824
        %v1841 = vpack.c.b16 %v1838, %v1837
        %v1842 = vpack.c.b16 %v1840, %v1839
        %v1846 = vsel %vm721, %v1819, 0
        %1848 = vmatprep.subr.bf16.mxu0 0
        %1849 = vmatpush1.bf16.msra.mxu0 %v1841
        %1850 = vmatprep.subr.bf16.mxu0 0
        %1851 = vmatpush1.bf16.msra.mxu0 %v1842
        %1852 = vmatprep.subr.bf16.mxu0 0
        %1853 = vmatpush1.bf16.msra.mxu0 0
        %1854 = vmatprep.subr.bf16.mxu0 0
        %1855 = vmatpush1.bf16.msra.mxu0 0
        %1856 = vmatprep.subr.bf16.mxu0 0
        %1857 = vmatpush1.bf16.msra.mxu0 0
        %1858 = vmatprep.subr.bf16.mxu0 0
        %1859 = vmatpush1.bf16.msra.mxu0 0
        %1860 = vmatprep.subr.bf16.mxu0 0
        %1861 = vmatpush1.bf16.msra.mxu0 0
        %1862 = vmatprep.subr.bf16.mxu0 0
        %1863 = vmatpush1.bf16.msra.mxu0 0
        %1864 = vmatprep.subr.bf16.mxu0 0
        %1865 = vmatpush1.bf16.msra.mxu0 0
        %1866 = vmatprep.subr.bf16.mxu0 0
        %1867 = vmatpush1.bf16.msra.mxu0 0
        %1868 = vmatprep.subr.bf16.mxu0 0
        %1869 = vmatpush1.bf16.msra.mxu0 0
        %1870 = vmatprep.subr.bf16.mxu0 0
        %1871 = vmatpush1.bf16.msra.mxu0 0
        %1872 = vmatprep.subr.bf16.mxu0 0
        %1873 = vmatpush1.bf16.msra.mxu0 0
        %1874 = vmatprep.subr.bf16.mxu0 0
        %1875 = vmatpush1.bf16.msra.mxu0 0
        %1876 = vmatprep.subr.bf16.mxu0 0
        %1877 = vmatpush1.bf16.msra.mxu0 0
        %1878 = vmatprep.subr.bf16.mxu0 0
        %1879 = vmatpush1.bf16.msra.mxu0 0
        %1880 = vmatprep.mubr.bf16.mxu0 0
        %1881 = vmatmul.mubr.bf16.gmra.mrb[0].mxu0 %v1846
        %v1882 = vpop.f32.mrb[0].mxu0
        %v1883 = vadd.f32 %v1831, %v1882
        %v1884 = vpop.f32.mrb[0].mxu0
        %v1885 = vpop.f32.mrb[0].mxu0
        %v1886 = vadd.f32 %v1831, %v1885
        %v1887 = vpop.f32.mrb[0].mxu0
        %1888 = vdwg.mxu0
        %v1889 = vmul.f32 %v1883, 0.5
        %v1890 = vmul.f32 %v1886, 0.5
        %v1891 = vmul.f32 %v1883, 0.70710677
        %v1892 = vmul.f32 %v1886, 0.70710677
        %v1893 = verf.f32.pop %v1891
        %v1894 = verf.f32.pop %v1892
        %v1895 = vadd.f32 %v1893, 1.0
        %v1896 = vadd.f32 %v1894, 1.0
        %v1897 = vmul.f32 %v1889, %v1895
        %v1898 = vmul.f32 %v1890, %v1896
        %v1899 = vpack.c.bf16 %v1898, %v1897
        %s1900 = scalar_lea.vmem %s12, 32
        %v1901 = vld [vmem:[%s1900] sm:$0xf]
        %v1902 = vld [vmem:[%s1900 + $0x4] sm:$0xf]
        %v1903 = vld [vmem:[%s1900 + $0x8] sm:$0xf]
        %v1904 = vld [vmem:[%s1900 + $0xc] sm:$0xf]
        %v1905 = vld [vmem:[%s1900 + $0x10] sm:$0xf]
        %v1906 = vld [vmem:[%s1900 + $0x14] sm:$0xf]
        %v1907 = vld [vmem:[%s1900 + $0x18] sm:$0xf]
        %v1908 = vld [vmem:[%s1900 + $0x1c] sm:$0xf]
        %s1909 = scalar_lea.vmem %s13, 1
        %v1910 = vld [vmem:[%s1909] sm:$0x1]
        %v1912 = vlaneseq
        %v1913 = vshrl.u32 %v1912, 7
        %v1914 = vsub.s32 0, %v1913
        %v1915 = vrot.slane %v1910, %v1914
        %v1925 = vunpack.c.l.b16 %v1901
        %v1926 = vunpack.c.l.b16 %v1902
        %v1927 = vunpack.c.l.b16 %v1903
        %v1928 = vunpack.c.l.b16 %v1904
        %v1929 = vunpack.c.l.b16 %v1905
        %v1930 = vunpack.c.l.b16 %v1906
        %v1931 = vunpack.c.l.b16 %v1907
        %v1932 = vunpack.c.l.b16 %v1908
        %v1933 = vpack.c.b16 %v1926, %v1925
        %v1934 = vpack.c.b16 %v1928, %v1927
        %v1935 = vpack.c.b16 %v1930, %v1929
        %v1936 = vpack.c.b16 %v1932, %v1931
        %v1942 = vsel %vm1288, %v1899, 0
        %1944 = vmatprep.subr.bf16.mxu0 0
        %1945 = vmatpush1.bf16.msra.mxu0 %v1933
        %1946 = vmatprep.subr.bf16.mxu0 0
        %1947 = vmatpush1.bf16.msra.mxu0 %v1934
        %1948 = vmatprep.subr.bf16.mxu0 0
        %1949 = vmatpush1.bf16.msra.mxu0 %v1935
        %1950 = vmatprep.subr.bf16.mxu0 0
        %1951 = vmatpush1.bf16.msra.mxu0 %v1936
        %1952 = vmatprep.subr.bf16.mxu0 0
        %1953 = vmatpush1.bf16.msra.mxu0 0
        %1954 = vmatprep.subr.bf16.mxu0 0
        %1955 = vmatpush1.bf16.msra.mxu0 0
        %1956 = vmatprep.subr.bf16.mxu0 0
        %1957 = vmatpush1.bf16.msra.mxu0 0
        %1958 = vmatprep.subr.bf16.mxu0 0
        %1959 = vmatpush1.bf16.msra.mxu0 0
        %1960 = vmatprep.subr.bf16.mxu0 0
        %1961 = vmatpush1.bf16.msra.mxu0 0
        %1962 = vmatprep.subr.bf16.mxu0 0
        %1963 = vmatpush1.bf16.msra.mxu0 0
        %1964 = vmatprep.subr.bf16.mxu0 0
        %1965 = vmatpush1.bf16.msra.mxu0 0
        %1966 = vmatprep.subr.bf16.mxu0 0
        %1967 = vmatpush1.bf16.msra.mxu0 0
        %1968 = vmatprep.subr.bf16.mxu0 0
        %1969 = vmatpush1.bf16.msra.mxu0 0
        %1970 = vmatprep.subr.bf16.mxu0 0
        %1971 = vmatpush1.bf16.msra.mxu0 0
        %1972 = vmatprep.subr.bf16.mxu0 0
        %1973 = vmatpush1.bf16.msra.mxu0 0
        %1974 = vmatprep.subr.bf16.mxu0 0
        %1975 = vmatpush1.bf16.msra.mxu0 0
        %1976 = vmatprep.mubr.bf16.mxu0 0
        %1977 = vmatmul.mubr.bf16.gmra.mrb[0].mxu0 %v1942
        %v1978 = vpop.f32.mrb[0].mxu0
        %v1979 = vadd.f32 %v1915, %v1978
        %v1980 = vpop.f32.mrb[0].mxu0
        %v1981 = vpop.f32.mrb[0].mxu0
        %v1982 = vadd.f32 %v1915, %v1981
        %v1983 = vpop.f32.mrb[0].mxu0
        %1984 = vdwg.mxu0
        %v1985 = vadd.f32 %v1979, %v1817
        %v1986 = vadd.f32 %v1982, %v1818
        %s1987 = scalar_lea.vmem %s14, 1
        %v1988 = vld [vmem:[%s1987] sm:$0x1]
        %s1989 = scalar_lea.vmem %s15, 1
        %v1990 = vld [vmem:[%s1989] sm:$0x1]
        %v1991 = vsel %vm721, %v1985, 0.0
        %1992 = vadd.xlane.f32.xlu0 %v1991
        %v1993 = vpop.xlane.xlu0 %1992
        %v1994 = vsel %vm718, %v1986, 0.0
        %1995 = vadd.xlane.f32.xlu0 %v1994
        %v1996 = vpop.xlane.xlu0 %1995
        %v1997 = vmul.f32 %v1993, %v1133
        %v1998 = vmul.f32 %v1996, %v1133
        %v1999 = vsub.f32 %v1985, %v1997
        %v2000 = vsub.f32 %v1986, %v1998
        %v2001 = vmul.f32 %v1999, %v1999
        %v2002 = vmul.f32 %v2000, %v2000
        %v2003 = vsel %vm721, %v2001, 0.0
        %2004 = vadd.xlane.f32.xlu0 %v2003
        %v2005 = vpop.xlane.xlu0 %2004
        %v2006 = vsel %vm718, %v2002, 0.0
        %2007 = vadd.xlane.f32.xlu0 %v2006
        %v2008 = vpop.xlane.xlu0 %2007
        %v2009 = vmul.f32 %v2005, %v1133
        %v2010 = vmul.f32 %v2008, %v1133
        %v2011 = vadd.f32 %v2009, 1e-05
        %v2012 = vadd.f32 %v2010, 1e-05
        %v2013 = vrsqrt.pop %v2011
        %v2014 = vrsqrt.pop %v2012
        %v2015 = vmul.f32 %v1999, %v2013
        %v2016 = vmul.f32 %v2000, %v2014
        %v2018 = vlaneseq
        %v2019 = vshrl.u32 %v2018, 7
        %v2020 = vsub.s32 0, %v2019
        %v2021 = vrot.slane %v1988, %v2020
        %v2023 = vmul.f32 %v2015, %v2021
        %v2024 = vmul.f32 %v2016, %v2021
        %v2026 = vlaneseq
        %v2027 = vshrl.u32 %v2026, 7
        %v2028 = vsub.s32 0, %v2027
        %v2029 = vrot.slane %v1990, %v2028
        %v2031 = vadd.f32 %v2023, %v2029
        %v2032 = vadd.f32 %v2024, %v2029
        %v2033 = vsel %vm721, %v2031, 0.0
        %v2034 = vsel %vm718, %v2032, 0.0
        %v2035 = vadd.f32 %v2033, %v2034
        %v2036 = vrot.slane %v2035, 4
        %v2037 = vadd.f32 %v2035, %v2036
        %v2038 = vrot.slane %v2037, 2
        %v2039 = vadd.f32 %v2037, %v2038
        %v2040 = vrot.slane %v2039, 1
        %v2041 = vadd.f32 %v2039, %v2040
        %v2042 = vrcp.pop 9.0
        %v2043 = vmul.f32 %v2041, %v2042
        %v2044 = vpack.c.bf16 %v2043, %v2043
        %v2045 = vld [vmem:[%s16] sm:$0xf]
        %v2046 = vld [vmem:[%s16 + $0x4] sm:$0xf]
        %v2047 = vld [vmem:[%s16 + $0x8] sm:$0xf]
        %v2048 = vld [vmem:[%s16 + $0xc] sm:$0xf]
        %v2049 = vld [vmem:[%s17] sm:$0x1]
        %v2054 = vunpack.c.l.b16 %v2045
        %v2055 = vunpack.c.l.b16 %v2046
        %v2056 = vunpack.c.l.b16 %v2047
        %v2057 = vunpack.c.l.b16 %v2048
        %v2058 = vpack.c.b16 %v2055, %v2054
        %v2059 = vpack.c.b16 %v2057, %v2056
        %v2063 = vsel %vm721, %v2044, 0
        %2065 = vmatprep.subr.bf16.mxu0 0
        %2066 = vmatpush1.bf16.msra.mxu0 %v2058
        %2067 = vmatprep.subr.bf16.mxu0 0
        %2068 = vmatpush1.bf16.msra.mxu0 %v2059
        %2069 = vmatprep.subr.bf16.mxu0 0
        %2070 = vmatpush1.bf16.msra.mxu0 0
        %2071 = vmatprep.subr.bf16.mxu0 0
        %2072 = vmatpush1.bf16.msra.mxu0 0
        %2073 = vmatprep.subr.bf16.mxu0 0
        %2074 = vmatpush1.bf16.msra.mxu0 0
        %2075 = vmatprep.subr.bf16.mxu0 0
        %2076 = vmatpush1.bf16.msra.mxu0 0
        %2077 = vmatprep.subr.bf16.mxu0 0
        %2078 = vmatpush1.bf16.msra.mxu0 0
        %2079 = vmatprep.subr.bf16.mxu0 0
        %2080 = vmatpush1.bf16.msra.mxu0 0
        %2081 = vmatprep.subr.bf16.mxu0 0
        %2082 = vmatpush1.bf16.msra.mxu0 0
        %2083 = vmatprep.subr.bf16.mxu0 0
        %2084 = vmatpush1.bf16.msra.mxu0 0
        %2085 = vmatprep.subr.bf16.mxu0 0
        %2086 = vmatpush1.bf16.msra.mxu0 0
        %2087 = vmatprep.subr.bf16.mxu0 0
        %2088 = vmatpush1.bf16.msra.mxu0 0
        %2089 = vmatprep.subr.bf16.mxu0 0
        %2090 = vmatpush1.bf16.msra.mxu0 0
        %2091 = vmatprep.subr.bf16.mxu0 0
        %2092 = vmatpush1.bf16.msra.mxu0 0
        %2093 = vmatprep.subr.bf16.mxu0 0
        %2094 = vmatpush1.bf16.msra.mxu0 0
        %2095 = vmatprep.subr.bf16.mxu0 0
        %2096 = vmatpush1.bf16.msra.mxu0 0
        %2097 = vmatprep.mubr.bf16.mxu0 0
        %2098 = vmatmul.mubr.bf16.gmra.mrb[0].mxu0 %v2063
        %v2099 = vpop.f32.mrb[0].mxu0
        %v2100 = vadd.f32 %v2049, %v2099
        %v2101 = vpop.f32.mrb[0].mxu0
        %v2102 = vpop.f32.mrb[0].mxu0
        %v2103 = vpop.f32.mrb[0].mxu0
        %2104 = vdwg.mxu0
        %vm2105 = vcmask 90112
        %2106 = vst.msk [vmem:[%s649] sm:$0x1] %vm2105, %v2100
        %s2107 = sand.u32 %s427, 1
        %s2108 = scalar_lea.sflag [#allocation6], %s2107
        %s2109 = sand.u32 %s427, 1
        %s2110 = scalar_lea.vmem [#allocation15], %s2109
        // Predicated region
        $region117: #{tpu_custom_call.1} parent=91 // pred_check
          %p2111 = pneg %p437
        $region118: #{tpu_custom_call.1} parent=91 // pred_check_branch
          %2113 = sbr.rel (%p2111) target = $region120
        $region119: #{tpu_custom_call.1} parent=91 // pred_region
          %s2115 = ssub.s32 16, 16
          %2116 = vsyncadd %s2108, %s2115
          %s2117 = smul.addr %s36, 16
          %s2118 = scalar_lea.hbm %s18, %s2117
          %s2120 = sshll.u32 %s2110, 4
          %s2121 = int_to_ptr.vmem [resolvable:$true] %s2120
          %2123 = dma.vmem_to_hbm [thread:$0]  %s2121, 16, %s2118, %s2108
        $region120: #{tpu_custom_call.1} parent=91 // pred_fallthru
          _
      $region92: #{tpu_custom_call.1} parent=5 // pred_fallthru
        _
      %p2124 = scmp.le.s32.totalorder 2, %s31
      // Predicated region
      $region121: #{tpu_custom_call.1} parent=5 // pred_check
        %p2125 = pneg %p2124
      $region122: #{tpu_custom_call.1} parent=5 // pred_check_branch
        %2127 = sbr.rel (%p2125) target = $region124
      $region123: #{tpu_custom_call.1} parent=5 // pred_region
        %s2128 = ssub.s32 %s31, 2
        // Predicated region
        $region125: #{tpu_custom_call.1} parent=123 // pred_check
          %p2129 = pneg %p443
        $region126: #{tpu_custom_call.1} parent=123 // pred_check_branch
          %2131 = sbr.rel (%p2129) target = $region128
        $region127: #{tpu_custom_call.1} parent=123 // pred_region
          %s2132 = sand.u32 %s428, 1
          %s2133 = scalar_lea.sflag [#allocation6], %s2132
          %s2134 = sand.u32 %s428, 1
          %s2135 = scalar_lea.vmem [#allocation15], %s2134
          %2136 = dma.done %s2133, 16
        $region128: #{tpu_custom_call.1} parent=123 // pred_fallthru
          _
      $region124: #{tpu_custom_call.1} parent=5 // pred_fallthru
        _
    $region6: #{tpu_custom_call.1} parent=1 // loop_footer
      %s35 = sadd.s32 1, %s31
    $region7: #{tpu_custom_call.1} parent=1 // loop_footer_branch
      %30 = sbr.rel target = $region3
    $region8: #{tpu_custom_call.1} parent=1 // loop_exit
      _
    %2137 = vsyncpa [#allocation5], 1
    %s2138 = scalar_lea.sflag [#allocation5], 1
    %2139 = vsyncpa %s2138, 1
    %2140 = vsyncpa [#allocation8], 1
    %2141 = vsyncpa [#allocation11], 1
    %2142 = vsyncpa [#allocation14], 1
    %2143 = vsyncpa [#allocation6], 1
    %s2144 = scalar_lea.sflag [#allocation6], 1
    %2145 = vsyncpa %s2144, 1

</llo_original>
